<compile_context>
chip_gen: v5e
topology: v5e:2x2
jax: 0.10.0
libtpu: 0.0.40
codegen_flags: <defaults>
</compile_context>

<pallas_src>
import functools
import math

import jax
import jax.numpy as jnp
from jax.experimental import pallas as pl
from jax.experimental.pallas import tpu as pltpu

PART = 6
FEAT_DIM = 2048
BOTTLENECK = 256
BN_EPS = 1e-5
LANE = 128
SUB = 8          # sublane granularity of the pooling sub-slices


def _pcb_head_kernel(x_ref, w1_ref, b1_ref, w2_ref, b2_ref, out_ref, acc_ref,
                     *, s_chunk, s_total, has_tail):
    # Grid: (part p [parallel], spatial-chunk s [arbitrary / reduction]).
    # x_ref block: (B, s_chunk, C) in the streaming dtype (bf16 or f32).
    s = pl.program_id(1)

    @pl.when(s == 0)
    def _init():
        acc_ref[...] = jnp.zeros_like(acc_ref)

    n_sub = s_chunk // SUB
    n_valid = s_total - s * s_chunk   # rows of this chunk that are real data

    def body(i, carry):
        base = pl.multiple_of(i * SUB, SUB)
        xs = x_ref[:, pl.ds(base, SUB), :].astype(jnp.float32)   # (B, SUB, C)
        if has_tail:
            # Zero out-of-range rows of the (clamped / garbage) tail block.
            row = base + jax.lax.broadcasted_iota(jnp.int32, xs.shape, 1)
            xs = jnp.where(row < n_valid, xs, 0.0)
        acc_ref[...] += jnp.sum(xs, axis=1)                      # (B, C) f32
        return carry

    jax.lax.fori_loop(0, n_sub, body, 0,
                      unroll=n_sub if n_sub <= 16 else 8)

    @pl.when(s == pl.num_programs(1) - 1)
    def _finish():
        pooled_sum = acc_ref[...]                                # (B, C) f32
        # Linear(2048->256); BN(eval) and the 1/S mean scale are pre-folded
        # into w1/b1 in the wrapper.  bf16 x bf16 MXU matmul, f32 accumulate.
        h = jnp.dot(pooled_sum.astype(jnp.bfloat16), w1_ref[...],
                    preferred_element_type=jnp.float32) + b1_ref[...]   # (B,256)
        # Dropout layers are identity in eval mode.
        # Classifier Linear(256 -> K_pad): bf16 MXU, f32 accumulate, f32 bias.
        logits = jnp.dot(h.astype(jnp.bfloat16), w2_ref[...],
                         preferred_element_type=jnp.float32) + b2_ref[...]
        out_ref[...] = logits


def _vmem_capacity_bytes():
    try:
        return int(pltpu.get_tpu_info().vmem_capacity_bytes)
    except Exception:
        return 64 << 20     # conservative fallback: v7x per-TensorCore VMEM


def _budgets(max_chunk_bytes_override=None):
    """Generation-aware (vmem_limit_bytes, max bytes per streamed x chunk)."""
    vmem_phys = _vmem_capacity_bytes()
    # ~25% headroom below physical VMEM, capped near the recommended limits:
    # v7x (64 MiB) -> 48 MiB, v5e/v6e (128 MiB) -> 96 MiB.
    vmem_limit = max(32 << 20, min(vmem_phys * 3 // 4, 100 << 20))
    # Double-buffered x blocks plus ~8 MiB for weights / biases / acc / out.
    cap = (16 << 20) if vmem_phys <= (64 << 20) else (24 << 20)
    max_chunk = min((vmem_limit - (8 << 20)) // 2, cap)
    if max_chunk_bytes_override is not None:
        max_chunk = int(max_chunk_bytes_override)
    return vmem_limit, max_chunk


def _choose_s_chunk(B, S, itemsize, max_chunk_bytes):
    """Largest multiple-of-SUB row count whose x block fits max_chunk_bytes."""
    rows_cap = max_chunk_bytes // (B * FEAT_DIM * itemsize)
    rows_cap = max(SUB, (rows_cap // SUB) * SUB)
    s_rounded = ((S + SUB - 1) // SUB) * SUB
    return min(rows_cap, s_rounded)


def pcb_head(feat_nhwc, w1, b1, gamma, beta, w2, b2, *, max_chunk_bytes=None):
    """PCB head on a channels-last backbone feature map.

    feat_nhwc: (B, H, W, 2048), H divisible by 6; streamed in its native dtype
               (bf16 preferred; f32 is streamed directly, no pre-cast copy).
    w1: (P, 2048, 256); b1/gamma/beta: (P, 1, 256); w2: (P, 256, K); b2: (P, 1, K)
    Returns a list of P arrays of shape (B, K) float32 (matches the PyTorch list).
    """
    B, H, W, C = feat_nhwc.shape
    assert C == FEAT_DIM and H % PART == 0
    hb = H // PART
    S = hb * W
    K = w2.shape[-1]
    K_pad = ((K + LANE - 1) // LANE) * LANE

    # NHWC -> (B, PART, S, C): layout-preserving reshape, no HBM transpose copy.
    x = feat_nhwc.reshape(B, PART, S, C)
    if x.dtype not in (jnp.bfloat16, jnp.float32):
        x = x.astype(jnp.bfloat16)
    itemsize = jnp.dtype(x.dtype).itemsize

    # Fold eval-mode BatchNorm1d (running_mean=0, running_var=1) and the 1/S
    # mean scale into the first Linear.
    inv_std = 1.0 / math.sqrt(1.0 + BN_EPS)
    scale = gamma.astype(jnp.float32) * inv_std                    # (P, 1, 256)
    w1f = (w1.astype(jnp.float32) * scale * (1.0 / S)).astype(jnp.bfloat16)
    b1f = b1.astype(jnp.float32) * scale + beta.astype(jnp.float32)

    # Pad the classifier to a lane-dense multiple of 128; stream w2 as bf16.
    if K_pad != K:
        w2 = jnp.pad(w2, ((0, 0), (0, 0), (0, K_pad - K)))
        b2 = jnp.pad(b2, ((0, 0), (0, 0), (0, K_pad - K)))
    w2 = w2.astype(jnp.bfloat16)
    b2 = b2.astype(jnp.float32)

    vmem_limit, max_chunk = _budgets(max_chunk_bytes)
    s_chunk = _choose_s_chunk(B, S, itemsize, max_chunk)
    n_s = pl.cdiv(S, s_chunk)
    has_tail = (S % s_chunk) != 0

    kernel = functools.partial(_pcb_head_kernel, s_chunk=s_chunk,
                               s_total=S, has_tail=has_tail)

    flops = int(2 * PART * B * (FEAT_DIM * BOTTLENECK + BOTTLENECK * K_pad)
                + PART * B * S * FEAT_DIM)
    bytes_accessed = int(x.size * itemsize + w1f.size * 2 + b1f.size * 4
                         + w2.size * 2 + b2.size * 4 + PART * B * K_pad * 4)

    out = pl.pallas_call(
        kernel,
        out_shape=jax.ShapeDtypeStruct((PART, B, K_pad), jnp.float32),
        grid_spec=pltpu.PrefetchScalarGridSpec(
            num_scalar_prefetch=0,
            grid=(PART, n_s),
            in_specs=[
                pl.BlockSpec((B, pl.Squeezed(), s_chunk, C),
                             lambda p, s: (0, p, s, 0)),                     # x
                pl.BlockSpec((pl.Squeezed(), FEAT_DIM, BOTTLENECK),
                             lambda p, s: (p, 0, 0)),                        # w1f
                pl.BlockSpec((pl.Squeezed(), 1, BOTTLENECK),
                             lambda p, s: (p, 0, 0)),                        # b1f
                pl.BlockSpec((pl.Squeezed(), BOTTLENECK, K_pad),
                             lambda p, s: (p, 0, 0)),                        # w2
                pl.BlockSpec((pl.Squeezed(), 1, K_pad),
                             lambda p, s: (p, 0, 0)),                        # b2
            ],
            out_specs=pl.BlockSpec((pl.Squeezed(), B, K_pad),
                                   lambda p, s: (p, 0, 0)),
            scratch_shapes=[pltpu.VMEM((B, FEAT_DIM), jnp.float32)],
        ),
        compiler_params=pltpu.CompilerParams(
            dimension_semantics=("parallel", "arbitrary"),
            vmem_limit_bytes=vmem_limit),
        cost_estimate=pl.CostEstimate(flops=flops, transcendentals=0,
                                      bytes_accessed=bytes_accessed),
    )(x, w1f, b1f, w2, b2)

    return [out[i, :, :K] for i in range(PART)]


def init_params(key, class_num):
    """Deterministic init mirroring weights_init_kaiming / weights_init_classifier."""
    keys = jax.random.split(key, 4 * PART)
    w1s, b1s, gammas, betas, w2s, b2s = [], [], [], [], [], []
    for i in range(PART):
        k_w1, k_g, k_w2, _ = keys[4 * i:4 * i + 4]
        # Linear(2048,256): kaiming_normal_, a=0, mode='fan_out' -> std=sqrt(2/256)
        std1 = math.sqrt(2.0 / BOTTLENECK)
        w1 = jax.random.normal(k_w1, (FEAT_DIM, BOTTLENECK), jnp.float32) * std1
        b1 = jnp.zeros((1, BOTTLENECK), jnp.float32)
        # BatchNorm1d(256): weight ~ N(1, 0.02), bias = 0
        gamma = 1.0 + 0.02 * jax.random.normal(k_g, (1, BOTTLENECK), jnp.float32)
        beta = jnp.zeros((1, BOTTLENECK), jnp.float32)
        # Linear(256, class_num): normal_(std=0.001), bias = 0
        w2 = jax.random.normal(k_w2, (BOTTLENECK, class_num), jnp.float32) * 0.001
        b2 = jnp.zeros((1, class_num), jnp.float32)
        w1s.append(w1); b1s.append(b1); gammas.append(gamma)
        betas.append(beta); w2s.append(w2); b2s.append(b2)
    return (jnp.stack(w1s), jnp.stack(b1s), jnp.stack(gammas),
            jnp.stack(betas), jnp.stack(w2s), jnp.stack(b2s))


def pcb_head_reference(feat_nhwc, w1, b1, gamma, beta, w2, b2):
    """Pure-JAX f32 reference (unfolded BN), on the same input features."""
    B, H, W, C = feat_nhwc.shape
    hb = H // PART
    x = feat_nhwc.astype(jnp.float32)
    outs = []
    for i in range(PART):
        part = x[:, i * hb:(i + 1) * hb, :, :]                 # (B, hb, W, C)
        pooled = jnp.mean(part, axis=(1, 2))                   # (B, C)
        h = pooled @ w1[i] + b1[i]
        h = (h / jnp.sqrt(1.0 + BN_EPS)) * gamma[i] + beta[i]
        outs.append(h @ w2[i] + b2[i])
    return outs


def _check(name, feat, params, class_num, **kwargs):
    ys = pcb_head(feat, *params, **kwargs)
    ys = [jax.block_until_ready(y) for y in ys]
    refs = pcb_head_reference(feat, *params)
    B = feat.shape[0]
    for y, r in zip(ys, refs):
        assert y.shape == (B, class_num)
        max_diff = float(jnp.max(jnp.abs(y - r)))
        assert jnp.allclose(y, r, atol=5e-3, rtol=5e-2), (
            f"[{name}] mismatch vs reference: max abs diff {max_diff}")


if __name__ == "__main__":
    key = jax.random.PRNGKey(0)
    k_feat, k_feat2, k_params = jax.random.split(key, 3)

    class_num = 8
    params = init_params(k_params, class_num)

    # 1) bf16 feature map (preferred path), default generation-aware chunking.
    B, H, W = 2, 12, 4
    feat_bf16 = jax.random.normal(
        k_feat, (B, H, W, FEAT_DIM), jnp.float32).astype(jnp.bfloat16)
    _check("bf16", feat_bf16, params, class_num)

    # 2) f32 feature map streamed directly (no wrapper-side bf16 cast copy).
    feat_f32 = jax.random.normal(k_feat, (B, H, W, FEAT_DIM), jnp.float32)
    _check("f32", feat_f32, params, class_num)

    # 3) Forced tiny chunk so the multi-chunk + masked-tail path is exercised
    #    (S=12, chunk=8 -> 2 chunks, 4-row tail).
    feat_tail = jax.random.normal(
        k_feat2, (B, 12, 6, FEAT_DIM), jnp.float32).astype(jnp.bfloat16)
    _check("tail", feat_tail, params, class_num, max_chunk_bytes=65536)

    print("KERNEL_OK")
</pallas_src>

<mosaic_0001>
module attributes {stable_mosaic.version = 11 : i64} {
  func.func @_pcb_head_kernel(%arg0: i32, %arg1: i32, %arg2: memref<2x1x8x2048xbf16, #tpu.memory_space<vmem>>, %arg3: memref<1x2048x256xbf16, #tpu.memory_space<vmem>>, %arg4: memref<1x1x256xf32, #tpu.memory_space<vmem>>, %arg5: memref<1x256x128xbf16, #tpu.memory_space<vmem>>, %arg6: memref<1x1x128xf32, #tpu.memory_space<vmem>>, %arg7: memref<1x2x128xf32, #tpu.memory_space<vmem>>, %arg8: memref<2x2048xf32, #tpu.memory_space<vmem>>) attributes {dimension_semantics = [#tpu.dimension_semantics<parallel>, #tpu.dimension_semantics<arbitrary>], iteration_bounds = array<i64: 6, 1>, scalar_prefetch = 0 : i64, scratch_operands = 1 : i64, tpu.core_type = #tpu.core_type<tc>, window_params = [{transform_indices = @transform_0, window_bounds = array<i64: 2, 1, 8, 2048>}, {transform_indices = @transform_1, window_bounds = array<i64: 1, 2048, 256>}, {transform_indices = @transform_2, window_bounds = array<i64: 1, 1, 256>}, {transform_indices = @transform_3, window_bounds = array<i64: 1, 256, 128>}, {transform_indices = @transform_4, window_bounds = array<i64: 1, 1, 128>}, {transform_indices = @transform_5, window_bounds = array<i64: 1, 2, 128>}]} {
    %c0_i32 = arith.constant 0 : i32
    %0 = arith.cmpi eq, %arg1, %c0_i32 : i32
    %1 = arith.extui %0 : i1 to i32
    %c0_i32_0 = arith.constant 0 : i32
    %2 = arith.cmpi ne, %1, %c0_i32_0 : i32
    scf.if %2 {
      %cst_10 = arith.constant 0.000000e+00 : f32
      %16 = vector.broadcast %cst_10 : f32 to vector<2x2048xf32>
      %c0_11 = arith.constant 0 : index
      %c0_12 = arith.constant 0 : index
      %17 = vector.load %arg8[%c0_11, %c0_12] : memref<2x2048xf32, #tpu.memory_space<vmem>>, vector<2x2048xf32>
      tpu.vector_store %arg8[%c0_11, %c0_12], %16 {strides = array<i32>} : memref<2x2048xf32, #tpu.memory_space<vmem>>, vector<2x2048xf32>,
    } else {
    }
    %c0_i32_1 = arith.constant 0 : i32
    %c8_i32 = arith.constant 8 : i32
    %3 = arith.muli %c0_i32_1, %c8_i32 : i32
    %4 = tpu.assume_multiple %3, 8 : i32
    %c0 = arith.constant 0 : index
    %c0_2 = arith.constant 0 : index
    %5 = arith.index_cast %4 : i32 to index
    %c0_3 = arith.constant 0 : index
    %6 = vector.load %arg2[%c0, %c0_2, %5, %c0_3] : memref<2x1x8x2048xbf16, #tpu.memory_space<vmem>>, vector<2x1x8x2048xbf16>
    %7 = vector.shape_cast %6 : vector<2x1x8x2048xbf16> to vector<2x8x2048xbf16>
    %8 = arith.extf %7 : vector<2x8x2048xbf16> to vector<2x8x2048xf32>
    %c0_4 = arith.constant 0 : index
    %c0_5 = arith.constant 0 : index
    %9 = vector.load %arg8[%c0_4, %c0_5] : memref<2x2048xf32, #tpu.memory_space<vmem>>, vector<2x2048xf32>
    %cst = arith.constant dense<0.000000e+00> : vector<2x2048xf32>
    %10 = vector.multi_reduction <add>, %8, %cst [1] : vector<2x8x2048xf32> to vector<2x2048xf32>
    %11 = arith.addf %9, %10 : vector<2x2048xf32>
    %c0_6 = arith.constant 0 : index
    %c0_7 = arith.constant 0 : index
    %12 = vector.load %arg8[%c0_6, %c0_7] : memref<2x2048xf32, #tpu.memory_space<vmem>>, vector<2x2048xf32>
    tpu.vector_store %arg8[%c0_6, %c0_7], %11 {strides = array<i32>} : memref<2x2048xf32, #tpu.memory_space<vmem>>, vector<2x2048xf32>,
    %c1_i32 = arith.constant 1 : i32
    %c0_i32_8 = arith.constant 0 : i32
    %13 = arith.cmpi eq, %arg1, %c0_i32_8 : i32
    %14 = arith.extui %13 : i1 to i32
    %c0_i32_9 = arith.constant 0 : i32
    %15 = arith.cmpi ne, %14, %c0_i32_9 : i32
    scf.if %15 {
      %c0_10 = arith.constant 0 : index
      %c0_11 = arith.constant 0 : index
      %16 = vector.load %arg8[%c0_10, %c0_11] : memref<2x2048xf32, #tpu.memory_space<vmem>>, vector<2x2048xf32>
      %17 = arith.truncf %16 : vector<2x2048xf32> to vector<2x2048xbf16>
      %c0_12 = arith.constant 0 : index
      %c0_13 = arith.constant 0 : index
      %c0_14 = arith.constant 0 : index
      %18 = vector.load %arg3[%c0_12, %c0_13, %c0_14] : memref<1x2048x256xbf16, #tpu.memory_space<vmem>>, vector<1x2048x256xbf16>
      %19 = vector.shape_cast %18 : vector<1x2048x256xbf16> to vector<2048x256xbf16>
      %cst_15 = arith.constant dense<0.000000e+00> : vector<2x256xf32>
      %20 = tpu.matmul %17, %19, %cst_15 {dimension_numbers = #tpu.dot_dimension_numbers<[1], [0], [0], [1], [0, 0, 1, 1], [], []>} : vector<2x2048xbf16>, vector<2048x256xbf16>, vector<2x256xf32> -> vector<2x256xf32>
      %c0_16 = arith.constant 0 : index
      %c0_17 = arith.constant 0 : index
      %c0_18 = arith.constant 0 : index
      %21 = vector.load %arg4[%c0_16, %c0_17, %c0_18] : memref<1x1x256xf32, #tpu.memory_space<vmem>>, vector<1x1x256xf32>
      %22 = vector.shape_cast %21 : vector<1x1x256xf32> to vector<1x256xf32>
      %23 = vector.broadcast %22 : vector<1x256xf32> to vector<2x256xf32>
      %24 = arith.addf %20, %23 : vector<2x256xf32>
      %25 = arith.truncf %24 : vector<2x256xf32> to vector<2x256xbf16>
      %c0_19 = arith.constant 0 : index
      %c0_20 = arith.constant 0 : index
      %c0_21 = arith.constant 0 : index
      %26 = vector.load %arg5[%c0_19, %c0_20, %c0_21] : memref<1x256x128xbf16, #tpu.memory_space<vmem>>, vector<1x256x128xbf16>
      %27 = vector.shape_cast %26 : vector<1x256x128xbf16> to vector<256x128xbf16>
      %cst_22 = arith.constant dense<0.000000e+00> : vector<2x128xf32>
      %28 = tpu.matmul %25, %27, %cst_22 {dimension_numbers = #tpu.dot_dimension_numbers<[1], [0], [0], [1], [0, 0, 1, 1], [], []>} : vector<2x256xbf16>, vector<256x128xbf16>, vector<2x128xf32> -> vector<2x128xf32>
      %c0_23 = arith.constant 0 : index
      %c0_24 = arith.constant 0 : index
      %c0_25 = arith.constant 0 : index
      %29 = vector.load %arg6[%c0_23, %c0_24, %c0_25] : memref<1x1x128xf32, #tpu.memory_space<vmem>>, vector<1x1x128xf32>
      %30 = vector.shape_cast %29 : vector<1x1x128xf32> to vector<1x128xf32>
      %31 = vector.broadcast %30 : vector<1x128xf32> to vector<2x128xf32>
      %32 = arith.addf %28, %31 : vector<2x128xf32>
      %c0_26 = arith.constant 0 : index
      %c0_27 = arith.constant 0 : index
      %c0_28 = arith.constant 0 : index
      %33 = vector.load %arg7[%c0_26, %c0_27, %c0_28] : memref<1x2x128xf32, #tpu.memory_space<vmem>>, vector<1x2x128xf32>
      %34 = vector.shape_cast %33 : vector<1x2x128xf32> to vector<2x128xf32>
      %35 = vector.shape_cast %32 : vector<2x128xf32> to vector<1x2x128xf32>
      tpu.vector_store %arg7[%c0_26, %c0_27, %c0_28], %35 {strides = array<i32>} : memref<1x2x128xf32, #tpu.memory_space<vmem>>, vector<1x2x128xf32>,
    } else {
    }
    return
  }
  func.func @transform_0(%arg0: i32, %arg1: i32) -> (i32, i32, i32, i32) {
    %c0_i32 = arith.constant 0 : i32
    %c0_i32_0 = arith.constant 0 : i32
    %c0_i32_1 = arith.constant 0 : i32
    return %c0_i32, %arg0, %arg1, %c0_i32_0 : i32, i32, i32, i32
  }
  func.func @transform_1(%arg0: i32, %arg1: i32) -> (i32, i32, i32) {
    %c0_i32 = arith.constant 0 : i32
    %c0_i32_0 = arith.constant 0 : i32
    %c0_i32_1 = arith.constant 0 : i32
    return %arg0, %c0_i32, %c0_i32_0 : i32, i32, i32
  }
  func.func @transform_2(%arg0: i32, %arg1: i32) -> (i32, i32, i32) {
    %c0_i32 = arith.constant 0 : i32
    %c0_i32_0 = arith.constant 0 : i32
    %c0_i32_1 = arith.constant 0 : i32
    return %arg0, %c0_i32, %c0_i32_0 : i32, i32, i32
  }
  func.func @transform_3(%arg0: i32, %arg1: i32) -> (i32, i32, i32) {
    %c0_i32 = arith.constant 0 : i32
    %c0_i32_0 = arith.constant 0 : i32
    %c0_i32_1 = arith.constant 0 : i32
    return %arg0, %c0_i32, %c0_i32_0 : i32, i32, i32
  }
  func.func @transform_4(%arg0: i32, %arg1: i32) -> (i32, i32, i32) {
    %c0_i32 = arith.constant 0 : i32
    %c0_i32_0 = arith.constant 0 : i32
    %c0_i32_1 = arith.constant 0 : i32
    return %arg0, %c0_i32, %c0_i32_0 : i32, i32, i32
  }
  func.func @transform_5(%arg0: i32, %arg1: i32) -> (i32, i32, i32) {
    %c0_i32 = arith.constant 0 : i32
    %c0_i32_0 = arith.constant 0 : i32
    %c0_i32_1 = arith.constant 0 : i32
    return %arg0, %c0_i32, %c0_i32_0 : i32, i32, i32
  }
}

</mosaic_0001>

<llo_original>
// kernel: tpu_custom_call.1
$region0: #{tpu_custom_call.1}
  #allocation0 [shape = 'u32[]', space=smem, size = 0x4, offset = 0x4, fixed_abs, tag = 'smem constant byte address 0x4 - core index']
  #allocation1 [shape = 'u32[72,128]{1,0:T(1,128)}', space=vmem, size = 0x9000, scoped, tag = 'internal scratch']
  #allocation2 [shape = 'f32[2,2048]{1,0:T(2,128)}', space=vmem, size = 0x4000, scoped, tag = 'scratch operand']
  %s0 = inlined_call_operand.hbm [shape: bf16[2,6,8,2048], index: 0, kind: input, shape index: {}]
  %s1 = inlined_call_operand.hbm [shape: bf16[6,2048,256], index: 1, kind: input, shape index: {}]
  %s2 = inlined_call_operand.hbm [shape: f32[6,1,256], index: 2, kind: input, shape index: {}]
  %s3 = inlined_call_operand.hbm [shape: bf16[6,256,128], index: 3, kind: input, shape index: {}]
  %s4 = inlined_call_operand.hbm [shape: f32[6,1,128], index: 4, kind: input, shape index: {}]
  %s5 = inlined_call_operand.hbm [shape: f32[6,2,128], index: 5, kind: output, shape index: {}]
  %s6 = sld [smem:[#allocation0]]
  $region81: #{tpu_custom_call.1} parent=0
    _
  %s8 = ssub.s32 1, %s6
  %s9 = scalar_select 0, %s8, %s6
  $region1: #{tpu_custom_call.1} parent=0
    #allocation3 [shape = 'u8[131072]{0}', space=vmem, size = 0x20000, scoped, tag = 'input window, operand 0']
    #allocation4 [shape = 's32[2]{0}', space=sflag, size = 0x8, scoped, tag = 'scoped memory for tpu_custom_call.1']
    #allocation5 [shape = 's32[2]{0}', space=sflag, size = 0x8, scoped, tag = 'scoped memory for tpu_custom_call.1']
    #allocation6 [shape = 'u8[2097152]{0}', space=vmem, size = 0x200000, scoped, tag = 'input window, operand 1']
    #allocation7 [shape = 's32[2]{0}', space=sflag, size = 0x8, scoped, tag = 'scoped memory for tpu_custom_call.1']
    #allocation8 [shape = 'u8[2048]{0}', space=vmem, size = 0x800, scoped, tag = 'input window, operand 2']
    #allocation9 [shape = 'u8[131072]{0}', space=vmem, size = 0x20000, scoped, tag = 'input window, operand 3']
    #allocation10 [shape = 's32[2]{0}', space=sflag, size = 0x8, scoped, tag = 'scoped memory for tpu_custom_call.1']
    #allocation11 [shape = 'u8[1024]{0}', space=vmem, size = 0x400, scoped, tag = 'input window, operand 4']
    #allocation12 [shape = 'u8[2048]{0}', space=vmem, size = 0x800, scoped, tag = 'output window, operand 0']
    %10 = vsyncpa [#allocation4], 0
    %s11 = scalar_lea.sflag [#allocation4], 1
    %12 = vsyncpa %s11, 0
    %13 = vsyncpa [#allocation7], 0
    %s14 = scalar_lea.sflag [#allocation7], 1
    %15 = vsyncpa %s14, 0
    %16 = vsyncpa [#allocation10], 0
    %s17 = scalar_lea.sflag [#allocation10], 1
    %18 = vsyncpa %s17, 0
    %19 = vsyncpa [#allocation5], 0
    %s20 = scalar_lea.sflag [#allocation5], 1
    %21 = vsyncpa %s20, 0
    loop: start=0, step=1, limit=8
    $region2: #{tpu_custom_call.1} parent=1 // loop_pre_header
      _
    $region3: #{tpu_custom_call.1} parent=1 // loop_header
      %s23 = sphi 0, %s27
      %p24 = scmp.ge.s32.totalorder %s23, 8
      %s30 = sphi 0, %s42
      %s31 = sphi 0, %s38
      %s32 = sphi 0, %s30
      %s33 = sphi 0, %s31
      %s34 = sphi 0, %s32
      %s35 = sphi 0, %s33
      %s47 = sphi 0, %s49
      %s50 = sphi 0, %s47
      %s51 = sphi 0, %s50
      %s67 = sphi 0, %s51
      %s73 = sphi 0, %s75
      %s76 = sphi 0, %s73
      %s77 = sphi 0, %s76
      %s93 = sphi 0, %s77
      %s99 = sphi 0, %s101
      %s102 = sphi 0, %s99
      %s103 = sphi 0, %s102
      %s119 = sphi 0, %s103
      %s125 = sphi 0, %s127
      %s128 = sphi 0, %s125
      %s129 = sphi 0, %s128
      %s145 = sphi 0, %s129
      %s151 = sphi 0, %s153
      %s154 = sphi 0, %s151
      %s155 = sphi 0, %s154
      %s171 = sphi 0, %s155
      %s177 = sphi 0, %s179
      %s180 = sphi 0, %s177
      %s181 = sphi 0, %s180
      %s197 = sphi 0, %s181
    $region4: #{tpu_custom_call.1} parent=1 // loop_header_branch
      %26 = sbr.rel (%p24) target = $region8
    $region5: #{tpu_custom_call.1} parent=1 // loop_body
      %s28 = ssub.s32 %s23, 1
      %s29 = ssub.s32 %s23, 2
      %s36 = sadd.s32 1, %s31
      %p37 = scmp.ge.s32.totalorder %s36, 1
      %s38 = scalar_select %p37, 0, %s36
      %s39 = sadd.s32 1, %s30
      %s40 = scalar_select %p37, %s39, %s30
      %p41 = scmp.ge.s32.totalorder %s40, 6
      %s42 = scalar_select %p41, 0, %s40
      %s43 = ssub.s32 %s30, %s42
      %s44 = ssub.s32 %s31, %s38
      %s45 = sor.u32 %s43, %s44
      %p46 = scmp.eq.s32.totalorder %s45, 0
      %s48 = sadd.s32 %s47, 1
      %s49 = scalar_select %p46, %s47, %s48
      %p52 = pneg %p46
      %p53 = scmp.eq.s32.totalorder %s23, 5
      %p54 = por %p52, %p53
      %p55 = scmp.ne.s32.totalorder %s47, %s50
      %p56 = scmp.eq.s32.totalorder %s23, 0
      %p57 = por %p55, %p56
      %p58 = scmp.ne.s32.totalorder %s47, %s50
      %p59 = scmp.eq.s32.totalorder %s28, 5
      %p60 = por %p58, %p59
      %p61 = scmp.ne.s32.totalorder %s50, %s51
      %p62 = scmp.eq.s32.totalorder %s28, 0
      %p63 = por %p61, %p62
      %p64 = scmp.ne.s32.totalorder %s50, %s51
      %p65 = scmp.eq.s32.totalorder %s29, 5
      %p66 = por %p64, %p65
      %p68 = scmp.ne.s32.totalorder %s51, %s67
      %p69 = scmp.eq.s32.totalorder %s29, 0
      %p70 = por %p68, %p69
      %s71 = ssub.s32 %s30, %s42
      %p72 = scmp.eq.s32.totalorder %s71, 0
      %s74 = sadd.s32 %s73, 1
      %s75 = scalar_select %p72, %s73, %s74
      %p78 = pneg %p72
      %p79 = scmp.eq.s32.totalorder %s23, 5
      %p80 = por %p78, %p79
      %p81 = scmp.ne.s32.totalorder %s73, %s76
      %p82 = scmp.eq.s32.totalorder %s23, 0
      %p83 = por %p81, %p82
      %p84 = scmp.ne.s32.totalorder %s73, %s76
      %p85 = scmp.eq.s32.totalorder %s28, 5
      %p86 = por %p84, %p85
      %p87 = scmp.ne.s32.totalorder %s76, %s77
      %p88 = scmp.eq.s32.totalorder %s28, 0
      %p89 = por %p87, %p88
      %p90 = scmp.ne.s32.totalorder %s76, %s77
      %p91 = scmp.eq.s32.totalorder %s29, 5
      %p92 = por %p90, %p91
      %p94 = scmp.ne.s32.totalorder %s77, %s93
      %p95 = scmp.eq.s32.totalorder %s29, 0
      %p96 = por %p94, %p95
      %s97 = ssub.s32 %s30, %s42
      %p98 = scmp.eq.s32.totalorder %s97, 0
      %s100 = sadd.s32 %s99, 1
      %s101 = scalar_select %p98, %s99, %s100
      %p104 = pneg %p98
      %p105 = scmp.eq.s32.totalorder %s23, 5
      %p106 = por %p104, %p105
      %p107 = scmp.ne.s32.totalorder %s99, %s102
      %p108 = scmp.eq.s32.totalorder %s23, 0
      %p109 = por %p107, %p108
      %p110 = scmp.ne.s32.totalorder %s99, %s102
      %p111 = scmp.eq.s32.totalorder %s28, 5
      %p112 = por %p110, %p111
      %p113 = scmp.ne.s32.totalorder %s102, %s103
      %p114 = scmp.eq.s32.totalorder %s28, 0
      %p115 = por %p113, %p114
      %p116 = scmp.ne.s32.totalorder %s102, %s103
      %p117 = scmp.eq.s32.totalorder %s29, 5
      %p118 = por %p116, %p117
      %p120 = scmp.ne.s32.totalorder %s103, %s119
      %p121 = scmp.eq.s32.totalorder %s29, 0
      %p122 = por %p120, %p121
      %s123 = ssub.s32 %s30, %s42
      %p124 = scmp.eq.s32.totalorder %s123, 0
      %s126 = sadd.s32 %s125, 1
      %s127 = scalar_select %p124, %s125, %s126
      %p130 = pneg %p124
      %p131 = scmp.eq.s32.totalorder %s23, 5
      %p132 = por %p130, %p131
      %p133 = scmp.ne.s32.totalorder %s125, %s128
      %p134 = scmp.eq.s32.totalorder %s23, 0
      %p135 = por %p133, %p134
      %p136 = scmp.ne.s32.totalorder %s125, %s128
      %p137 = scmp.eq.s32.totalorder %s28, 5
      %p138 = por %p136, %p137
      %p139 = scmp.ne.s32.totalorder %s128, %s129
      %p140 = scmp.eq.s32.totalorder %s28, 0
      %p141 = por %p139, %p140
      %p142 = scmp.ne.s32.totalorder %s128, %s129
      %p143 = scmp.eq.s32.totalorder %s29, 5
      %p144 = por %p142, %p143
      %p146 = scmp.ne.s32.totalorder %s129, %s145
      %p147 = scmp.eq.s32.totalorder %s29, 0
      %p148 = por %p146, %p147
      %s149 = ssub.s32 %s30, %s42
      %p150 = scmp.eq.s32.totalorder %s149, 0
      %s152 = sadd.s32 %s151, 1
      %s153 = scalar_select %p150, %s151, %s152
      %p156 = pneg %p150
      %p157 = scmp.eq.s32.totalorder %s23, 5
      %p158 = por %p156, %p157
      %p159 = scmp.ne.s32.totalorder %s151, %s154
      %p160 = scmp.eq.s32.totalorder %s23, 0
      %p161 = por %p159, %p160
      %p162 = scmp.ne.s32.totalorder %s151, %s154
      %p163 = scmp.eq.s32.totalorder %s28, 5
      %p164 = por %p162, %p163
      %p165 = scmp.ne.s32.totalorder %s154, %s155
      %p166 = scmp.eq.s32.totalorder %s28, 0
      %p167 = por %p165, %p166
      %p168 = scmp.ne.s32.totalorder %s154, %s155
      %p169 = scmp.eq.s32.totalorder %s29, 5
      %p170 = por %p168, %p169
      %p172 = scmp.ne.s32.totalorder %s155, %s171
      %p173 = scmp.eq.s32.totalorder %s29, 0
      %p174 = por %p172, %p173
      %s175 = ssub.s32 %s30, %s42
      %p176 = scmp.eq.s32.totalorder %s175, 0
      %s178 = sadd.s32 %s177, 1
      %s179 = scalar_select %p176, %s177, %s178
      %p182 = pneg %p176
      %p183 = scmp.eq.s32.totalorder %s23, 5
      %p184 = por %p182, %p183
      %p185 = scmp.ne.s32.totalorder %s177, %s180
      %p186 = scmp.eq.s32.totalorder %s23, 0
      %p187 = por %p185, %p186
      %p188 = scmp.ne.s32.totalorder %s177, %s180
      %p189 = scmp.eq.s32.totalorder %s28, 5
      %p190 = por %p188, %p189
      %p191 = scmp.ne.s32.totalorder %s180, %s181
      %p192 = scmp.eq.s32.totalorder %s28, 0
      %p193 = por %p191, %p192
      %p194 = scmp.ne.s32.totalorder %s180, %s181
      %p195 = scmp.eq.s32.totalorder %s29, 5
      %p196 = por %p194, %p195
      %p198 = scmp.ne.s32.totalorder %s181, %s197
      %p199 = scmp.eq.s32.totalorder %s29, 0
      %p200 = por %p198, %p199
      %p201 = scmp.le.s32.totalorder 1, %s23
      %p202 = scmp.lt.s32.totalorder %s23, 7
      %p203 = pnand %p201, %p202
      %p204 = pneg %p203
      // Predicated region
      $region9: #{tpu_custom_call.1} parent=5 // pred_check
        _
      $region10: #{tpu_custom_call.1} parent=5 // pred_check_branch
        %206 = sbr.rel (%p203) target = $region12
      $region11: #{tpu_custom_call.1} parent=5 // pred_region
        %s207 = ssub.s32 %s23, 1
      $region12: #{tpu_custom_call.1} parent=5 // pred_fallthru
        _
      %p208 = scmp.lt.s32.totalorder %s23, 6
      // Predicated region
      $region13: #{tpu_custom_call.1} parent=5 // pred_check
        %p209 = pneg %p208
      $region14: #{tpu_custom_call.1} parent=5 // pred_check_branch
        %211 = sbr.rel (%p209) target = $region16
      $region15: #{tpu_custom_call.1} parent=5 // pred_region
        // Predicated region
        $region17: #{tpu_custom_call.1} parent=15 // pred_check
          %p212 = pneg %p57
        $region18: #{tpu_custom_call.1} parent=15 // pred_check_branch
          %214 = sbr.rel (%p212) target = $region20
        $region19: #{tpu_custom_call.1} parent=15 // pred_region
          %s215 = sand.u32 %s47, 1
          %s216 = scalar_lea.sflag [#allocation4], %s215
          %s217 = sand.u32 %s47, 1
          %s218 = smul.addr %s217, 128
          %s219 = scalar_lea.vmem [#allocation3], %s218
          %221 = vsyncadd %s216, 0
          %s222 = smul.addr %s31, 16
          %s223 = smul.addr %s30, 16
          %s224 = sadd.s32 %s222, %s223
          %s225 = smul.addr %s224, 4
          %s226 = scalar_lea.hbm %s0, %s225
          %s227 = sshll.u32 %s226, 4
          %s228 = int_to_ptr.hbm [resolvable:$true] %s227
          %s229 = sshll.u32 %s219, 4
          %s230 = int_to_ptr.vmem [resolvable:$true] %s229
          %235 = dma.hbm_to_vmem [thread:$0]  %s228, 2048, %s230, %s216, 6144, 1024, 64
        $region20: #{tpu_custom_call.1} parent=15 // pred_fallthru
          _
        // Predicated region
        $region21: #{tpu_custom_call.1} parent=15 // pred_check
          %p236 = pneg %p83
        $region22: #{tpu_custom_call.1} parent=15 // pred_check_branch
          %238 = sbr.rel (%p236) target = $region24
        $region23: #{tpu_custom_call.1} parent=15 // pred_region
          %s239 = sand.u32 %s23, 1
          %s240 = scalar_lea.sflag [#allocation7], %s239
          %s241 = sand.u32 %s73, 1
          %s242 = smul.addr %s241, 2048
          %s243 = scalar_lea.vmem [#allocation6], %s242
          %245 = vsyncadd %s240, 0
          %s246 = smul.addr %s30, 512
          %s247 = smul.addr %s246, 4
          %s248 = scalar_lea.hbm %s1, %s247
          %s249 = sshll.u32 %s248, 4
          %s250 = int_to_ptr.hbm [resolvable:$true] %s249
          %s251 = sshll.u32 %s243, 4
          %s252 = int_to_ptr.vmem [resolvable:$true] %s251
          %257 = dma.hbm_to_vmem [thread:$0]  %s250, 32768, %s252, %s240, 128, 128, 8
        $region24: #{tpu_custom_call.1} parent=15 // pred_fallthru
          _
        // Predicated region
        $region25: #{tpu_custom_call.1} parent=15 // pred_check
          %p258 = pneg %p109
        $region26: #{tpu_custom_call.1} parent=15 // pred_check_branch
          %260 = sbr.rel (%p258) target = $region28
        $region27: #{tpu_custom_call.1} parent=15 // pred_region
          %s261 = sand.u32 %s23, 1
          %s262 = scalar_lea.sflag [#allocation7], %s261
          %s263 = sand.u32 %s99, 1
          %s264 = smul.addr %s263, 2
          %s265 = scalar_lea.vmem [#allocation8], %s264
          %267 = vsyncadd %s262, 0
          %s268 = smul.addr %s30, 2
          %s269 = scalar_lea.hbm %s2, %s268
          %s271 = sshll.u32 %s269, 4
          %s272 = int_to_ptr.hbm [resolvable:$true] %s271
          %s273 = sshll.u32 %s265, 4
          %s274 = int_to_ptr.vmem [resolvable:$true] %s273
          %276 = dma.hbm_to_vmem [thread:$0]  %s272, 32, %s274, %s262
        $region28: #{tpu_custom_call.1} parent=15 // pred_fallthru
          _
        // Predicated region
        $region29: #{tpu_custom_call.1} parent=15 // pred_check
          %p277 = pneg %p135
        $region30: #{tpu_custom_call.1} parent=15 // pred_check_branch
          %279 = sbr.rel (%p277) target = $region32
        $region31: #{tpu_custom_call.1} parent=15 // pred_region
          %s280 = sand.u32 %s23, 1
          %s281 = scalar_lea.sflag [#allocation10], %s280
          %s282 = sand.u32 %s125, 1
          %s283 = smul.addr %s282, 128
          %s284 = scalar_lea.vmem [#allocation9], %s283
          %286 = vsyncadd %s281, 0
          %s287 = smul.addr %s30, 32
          %s288 = smul.addr %s287, 4
          %s289 = scalar_lea.hbm %s3, %s288
          %s290 = sshll.u32 %s289, 4
          %s291 = int_to_ptr.hbm [resolvable:$true] %s290
          %s292 = sshll.u32 %s284, 4
          %s293 = int_to_ptr.vmem [resolvable:$true] %s292
          %298 = dma.hbm_to_vmem [thread:$0]  %s291, 2048, %s293, %s281, 64, 64, 4
        $region32: #{tpu_custom_call.1} parent=15 // pred_fallthru
          _
        // Predicated region
        $region33: #{tpu_custom_call.1} parent=15 // pred_check
          %p299 = pneg %p161
        $region34: #{tpu_custom_call.1} parent=15 // pred_check_branch
          %301 = sbr.rel (%p299) target = $region36
        $region35: #{tpu_custom_call.1} parent=15 // pred_region
          %s302 = sand.u32 %s23, 1
          %s303 = scalar_lea.sflag [#allocation10], %s302
          %s304 = sand.u32 %s151, 1
          %s305 = scalar_lea.vmem [#allocation11], %s304
          %307 = vsyncadd %s303, 0
          %s308 = scalar_lea.hbm %s4, %s30
          %s310 = sshll.u32 %s308, 4
          %s311 = int_to_ptr.hbm [resolvable:$true] %s310
          %s312 = sshll.u32 %s305, 4
          %s313 = int_to_ptr.vmem [resolvable:$true] %s312
          %315 = dma.hbm_to_vmem [thread:$0]  %s311, 16, %s313, %s303
        $region36: #{tpu_custom_call.1} parent=15 // pred_fallthru
          _
      $region16: #{tpu_custom_call.1} parent=5 // pred_fallthru
        _
      %p316 = scmp.le.s32.totalorder 1, %s23
      %p317 = scmp.lt.s32.totalorder %s23, 7
      %p318 = pnand %p316, %p317
      %p319 = pneg %p318
      // Predicated region
      $region37: #{tpu_custom_call.1} parent=5 // pred_check
        _
      $region38: #{tpu_custom_call.1} parent=5 // pred_check_branch
        %321 = sbr.rel (%p318) target = $region40
      $region39: #{tpu_custom_call.1} parent=5 // pred_region
        %s322 = ssub.s32 %s23, 1
        %s323 = sand.u32 %s50, 1
        %s324 = scalar_lea.sflag [#allocation4], %s323
        %s325 = sand.u32 %s50, 1
        %s326 = smul.addr %s325, 128
        %s327 = scalar_lea.vmem [#allocation3], %s326
        // Predicated region
        $region41: #{tpu_custom_call.1} parent=39 // pred_check
          %p328 = pneg %p63
        $region42: #{tpu_custom_call.1} parent=39 // pred_check_branch
          %330 = sbr.rel (%p328) target = $region44
        $region43: #{tpu_custom_call.1} parent=39 // pred_region
          %332 = dma.done %s324, 2048
        $region44: #{tpu_custom_call.1} parent=39 // pred_fallthru
          _
        %s333 = sand.u32 %s28, 1
        %s334 = scalar_lea.sflag [#allocation7], %s333
        %s335 = sand.u32 %s76, 1
        %s336 = smul.addr %s335, 2048
        %s337 = scalar_lea.vmem [#allocation6], %s336
        // Predicated region
        $region45: #{tpu_custom_call.1} parent=39 // pred_check
          %p338 = pneg %p89
        $region46: #{tpu_custom_call.1} parent=39 // pred_check_branch
          %340 = sbr.rel (%p338) target = $region48
        $region47: #{tpu_custom_call.1} parent=39 // pred_region
          %342 = dma.done %s334, 32768
        $region48: #{tpu_custom_call.1} parent=39 // pred_fallthru
          _
        %s343 = sand.u32 %s28, 1
        %s344 = scalar_lea.sflag [#allocation7], %s343
        %s345 = sand.u32 %s102, 1
        %s346 = smul.addr %s345, 2
        %s347 = scalar_lea.vmem [#allocation8], %s346
        // Predicated region
        $region49: #{tpu_custom_call.1} parent=39 // pred_check
          %p348 = pneg %p115
        $region50: #{tpu_custom_call.1} parent=39 // pred_check_branch
          %350 = sbr.rel (%p348) target = $region52
        $region51: #{tpu_custom_call.1} parent=39 // pred_region
          %352 = dma.done %s344, 32
        $region52: #{tpu_custom_call.1} parent=39 // pred_fallthru
          _
        %s353 = sand.u32 %s28, 1
        %s354 = scalar_lea.sflag [#allocation10], %s353
        %s355 = sand.u32 %s128, 1
        %s356 = smul.addr %s355, 128
        %s357 = scalar_lea.vmem [#allocation9], %s356
        // Predicated region
        $region53: #{tpu_custom_call.1} parent=39 // pred_check
          %p358 = pneg %p141
        $region54: #{tpu_custom_call.1} parent=39 // pred_check_branch
          %360 = sbr.rel (%p358) target = $region56
        $region55: #{tpu_custom_call.1} parent=39 // pred_region
          %362 = dma.done %s354, 2048
        $region56: #{tpu_custom_call.1} parent=39 // pred_fallthru
          _
        %s363 = sand.u32 %s28, 1
        %s364 = scalar_lea.sflag [#allocation10], %s363
        %s365 = sand.u32 %s154, 1
        %s366 = scalar_lea.vmem [#allocation11], %s365
        // Predicated region
        $region57: #{tpu_custom_call.1} parent=39 // pred_check
          %p367 = pneg %p167
        $region58: #{tpu_custom_call.1} parent=39 // pred_check_branch
          %369 = sbr.rel (%p367) target = $region60
        $region59: #{tpu_custom_call.1} parent=39 // pred_region
          %371 = dma.done %s364, 16
        $region60: #{tpu_custom_call.1} parent=39 // pred_fallthru
          _
        %s372 = sand.u32 %s50, 1
        %s373 = scalar_lea.sflag [#allocation4], %s372
        %s374 = sand.u32 %s50, 1
        %s375 = smul.addr %s374, 128
        %s376 = scalar_lea.vmem [#allocation3], %s375
        %p377 = pneg %p63
        %p378 = pneg %p60
        %s379 = sand.u32 %s28, 1
        %s380 = scalar_lea.sflag [#allocation7], %s379
        %s381 = sand.u32 %s76, 1
        %s382 = smul.addr %s381, 2048
        %s383 = scalar_lea.vmem [#allocation6], %s382
        %p384 = pneg %p89
        %p385 = pneg %p86
        %s386 = sand.u32 %s28, 1
        %s387 = scalar_lea.sflag [#allocation7], %s386
        %s388 = sand.u32 %s102, 1
        %s389 = smul.addr %s388, 2
        %s390 = scalar_lea.vmem [#allocation8], %s389
        %p391 = pneg %p115
        %p392 = pneg %p112
        %s393 = sand.u32 %s28, 1
        %s394 = scalar_lea.sflag [#allocation10], %s393
        %s395 = sand.u32 %s128, 1
        %s396 = smul.addr %s395, 128
        %s397 = scalar_lea.vmem [#allocation9], %s396
        %p398 = pneg %p141
        %p399 = pneg %p138
        %s400 = sand.u32 %s28, 1
        %s401 = scalar_lea.sflag [#allocation10], %s400
        %s402 = sand.u32 %s154, 1
        %s403 = scalar_lea.vmem [#allocation11], %s402
        %p404 = pneg %p167
        %p405 = pneg %p164
        %p406 = pneg %p193
        %p407 = pneg %p190
        %s408 = sand.u32 %s180, 1
        %s409 = scalar_lea.sflag [#allocation5], %s408
        %s410 = sand.u32 %s180, 1
        %s411 = smul.addr %s410, 2
        %s412 = scalar_lea.vmem [#allocation12], %s411
        %p413 = scmp.eq.s32.totalorder %s33, 0
        // Predicated region
        $region61: #{tpu_custom_call.1} parent=39 // pred_check
          %p414 = pneg %p413
        $region62: #{tpu_custom_call.1} parent=39 // pred_check_branch
          %416 = sbr.rel (%p414) target = $region64
        $region63: #{tpu_custom_call.1} parent=39 // pred_region
          %417 = vst [vmem:[#allocation2] sm:$0xff] 0.0
          %418 = vst [vmem:[#allocation2 + $0x8] sm:$0xff] 0.0
          %419 = vst [vmem:[#allocation2 + $0x10] sm:$0xff] 0.0
          %420 = vst [vmem:[#allocation2 + $0x18] sm:$0xff] 0.0
        $region64: #{tpu_custom_call.1} parent=39 // pred_fallthru
          _
        %s421 = smul.u32 0, 16
        %s422 = smul.addr %s421, 4
        %s423 = scalar_lea.vmem %s327, %s422 [#allocation3]
        %v424 = vld [vmem:[%s423] sm:$0xff]
        %v425 = vld [vmem:[%s423 + $0x8] sm:$0xff]
        %v426 = vld [vmem:[%s423 + $0x10] sm:$0xff]
        %v427 = vld [vmem:[%s423 + $0x18] sm:$0xff]
        %v428 = vld [vmem:[%s423 + $0x20] sm:$0xff]
        %v429 = vld [vmem:[%s423 + $0x28] sm:$0xff]
        %v430 = vld [vmem:[%s423 + $0x30] sm:$0xff]
        %v431 = vld [vmem:[%s423 + $0x38] sm:$0xff]
        %v432 = vld [vmem:[%s423 + $0x40] sm:$0xff]
        %v433 = vld [vmem:[%s423 + $0x48] sm:$0xff]
        %v434 = vld [vmem:[%s423 + $0x50] sm:$0xff]
        %v435 = vld [vmem:[%s423 + $0x58] sm:$0xff]
        %v436 = vld [vmem:[%s423 + $0x60] sm:$0xff]
        %v437 = vld [vmem:[%s423 + $0x68] sm:$0xff]
        %v438 = vld [vmem:[%s423 + $0x70] sm:$0xff]
        %v439 = vld [vmem:[%s423 + $0x78] sm:$0xff]
        %v440 = vunpack.c.l.bf16 %v424
        %v441 = vunpack.c.h.bf16 %v424
        %v442 = vunpack.c.l.bf16 %v425
        %v443 = vunpack.c.h.bf16 %v425
        %v444 = vunpack.c.l.bf16 %v426
        %v445 = vunpack.c.h.bf16 %v426
        %v446 = vunpack.c.l.bf16 %v427
        %v447 = vunpack.c.h.bf16 %v427
        %v448 = vunpack.c.l.bf16 %v428
        %v449 = vunpack.c.h.bf16 %v428
        %v450 = vunpack.c.l.bf16 %v429
        %v451 = vunpack.c.h.bf16 %v429
        %v452 = vunpack.c.l.bf16 %v430
        %v453 = vunpack.c.h.bf16 %v430
        %v454 = vunpack.c.l.bf16 %v431
        %v455 = vunpack.c.h.bf16 %v431
        %v456 = vunpack.c.l.bf16 %v432
        %v457 = vunpack.c.h.bf16 %v432
        %v458 = vunpack.c.l.bf16 %v433
        %v459 = vunpack.c.h.bf16 %v433
        %v460 = vunpack.c.l.bf16 %v434
        %v461 = vunpack.c.h.bf16 %v434
        %v462 = vunpack.c.l.bf16 %v435
        %v463 = vunpack.c.h.bf16 %v435
        %v464 = vunpack.c.l.bf16 %v436
        %v465 = vunpack.c.h.bf16 %v436
        %v466 = vunpack.c.l.bf16 %v437
        %v467 = vunpack.c.h.bf16 %v437
        %v468 = vunpack.c.l.bf16 %v438
        %v469 = vunpack.c.h.bf16 %v438
        %v470 = vunpack.c.l.bf16 %v439
        %v471 = vunpack.c.h.bf16 %v439
        %v472 = vld [vmem:[#allocation2] sm:$0xff]
        %v473 = vld [vmem:[#allocation2 + $0x8] sm:$0xff]
        %v474 = vld [vmem:[#allocation2 + $0x10] sm:$0xff]
        %v475 = vld [vmem:[#allocation2 + $0x18] sm:$0xff]
        %v476 = vrot.slane %v440, 4
        %v477 = vadd.f32 %v440, %v476
        %v478 = vrot.slane %v477, 2
        %v479 = vadd.f32 %v477, %v478
        %v480 = vrot.slane %v479, 1
        %v481 = vadd.f32 %v479, %v480
        %v482 = vrot.slane %v441, 4
        %v483 = vadd.f32 %v441, %v482
        %v484 = vrot.slane %v483, 2
        %v485 = vadd.f32 %v483, %v484
        %v486 = vrot.slane %v485, 1
        %v487 = vadd.f32 %v485, %v486
        %v488 = vrot.slane %v442, 4
        %v489 = vadd.f32 %v442, %v488
        %v490 = vrot.slane %v489, 2
        %v491 = vadd.f32 %v489, %v490
        %v492 = vrot.slane %v491, 1
        %v493 = vadd.f32 %v491, %v492
        %v494 = vrot.slane %v443, 4
        %v495 = vadd.f32 %v443, %v494
        %v496 = vrot.slane %v495, 2
        %v497 = vadd.f32 %v495, %v496
        %v498 = vrot.slane %v497, 1
        %v499 = vadd.f32 %v497, %v498
        %v500 = vrot.slane %v444, 4
        %v501 = vadd.f32 %v444, %v500
        %v502 = vrot.slane %v501, 2
        %v503 = vadd.f32 %v501, %v502
        %v504 = vrot.slane %v503, 1
        %v505 = vadd.f32 %v503, %v504
        %v506 = vrot.slane %v445, 4
        %v507 = vadd.f32 %v445, %v506
        %v508 = vrot.slane %v507, 2
        %v509 = vadd.f32 %v507, %v508
        %v510 = vrot.slane %v509, 1
        %v511 = vadd.f32 %v509, %v510
        %v512 = vrot.slane %v446, 4
        %v513 = vadd.f32 %v446, %v512
        %v514 = vrot.slane %v513, 2
        %v515 = vadd.f32 %v513, %v514
        %v516 = vrot.slane %v515, 1
        %v517 = vadd.f32 %v515, %v516
        %v518 = vrot.slane %v447, 4
        %v519 = vadd.f32 %v447, %v518
        %v520 = vrot.slane %v519, 2
        %v521 = vadd.f32 %v519, %v520
        %v522 = vrot.slane %v521, 1
        %v523 = vadd.f32 %v521, %v522
        %v524 = vrot.slane %v448, 4
        %v525 = vadd.f32 %v448, %v524
        %v526 = vrot.slane %v525, 2
        %v527 = vadd.f32 %v525, %v526
        %v528 = vrot.slane %v527, 1
        %v529 = vadd.f32 %v527, %v528
        %v530 = vrot.slane %v449, 4
        %v531 = vadd.f32 %v449, %v530
        %v532 = vrot.slane %v531, 2
        %v533 = vadd.f32 %v531, %v532
        %v534 = vrot.slane %v533, 1
        %v535 = vadd.f32 %v533, %v534
        %v536 = vrot.slane %v450, 4
        %v537 = vadd.f32 %v450, %v536
        %v538 = vrot.slane %v537, 2
        %v539 = vadd.f32 %v537, %v538
        %v540 = vrot.slane %v539, 1
        %v541 = vadd.f32 %v539, %v540
        %v542 = vrot.slane %v451, 4
        %v543 = vadd.f32 %v451, %v542
        %v544 = vrot.slane %v543, 2
        %v545 = vadd.f32 %v543, %v544
        %v546 = vrot.slane %v545, 1
        %v547 = vadd.f32 %v545, %v546
        %v548 = vrot.slane %v452, 4
        %v549 = vadd.f32 %v452, %v548
        %v550 = vrot.slane %v549, 2
        %v551 = vadd.f32 %v549, %v550
        %v552 = vrot.slane %v551, 1
        %v553 = vadd.f32 %v551, %v552
        %v554 = vrot.slane %v453, 4
        %v555 = vadd.f32 %v453, %v554
        %v556 = vrot.slane %v555, 2
        %v557 = vadd.f32 %v555, %v556
        %v558 = vrot.slane %v557, 1
        %v559 = vadd.f32 %v557, %v558
        %v560 = vrot.slane %v454, 4
        %v561 = vadd.f32 %v454, %v560
        %v562 = vrot.slane %v561, 2
        %v563 = vadd.f32 %v561, %v562
        %v564 = vrot.slane %v563, 1
        %v565 = vadd.f32 %v563, %v564
        %v566 = vrot.slane %v455, 4
        %v567 = vadd.f32 %v455, %v566
        %v568 = vrot.slane %v567, 2
        %v569 = vadd.f32 %v567, %v568
        %v570 = vrot.slane %v569, 1
        %v571 = vadd.f32 %v569, %v570
        %v572 = vrot.slane %v456, 4
        %v573 = vadd.f32 %v456, %v572
        %v574 = vrot.slane %v573, 2
        %v575 = vadd.f32 %v573, %v574
        %v576 = vrot.slane %v575, 1
        %v577 = vadd.f32 %v575, %v576
        %v578 = vrot.slane %v457, 4
        %v579 = vadd.f32 %v457, %v578
        %v580 = vrot.slane %v579, 2
        %v581 = vadd.f32 %v579, %v580
        %v582 = vrot.slane %v581, 1
        %v583 = vadd.f32 %v581, %v582
        %v584 = vrot.slane %v458, 4
        %v585 = vadd.f32 %v458, %v584
        %v586 = vrot.slane %v585, 2
        %v587 = vadd.f32 %v585, %v586
        %v588 = vrot.slane %v587, 1
        %v589 = vadd.f32 %v587, %v588
        %v590 = vrot.slane %v459, 4
        %v591 = vadd.f32 %v459, %v590
        %v592 = vrot.slane %v591, 2
        %v593 = vadd.f32 %v591, %v592
        %v594 = vrot.slane %v593, 1
        %v595 = vadd.f32 %v593, %v594
        %v596 = vrot.slane %v460, 4
        %v597 = vadd.f32 %v460, %v596
        %v598 = vrot.slane %v597, 2
        %v599 = vadd.f32 %v597, %v598
        %v600 = vrot.slane %v599, 1
        %v601 = vadd.f32 %v599, %v600
        %v602 = vrot.slane %v461, 4
        %v603 = vadd.f32 %v461, %v602
        %v604 = vrot.slane %v603, 2
        %v605 = vadd.f32 %v603, %v604
        %v606 = vrot.slane %v605, 1
        %v607 = vadd.f32 %v605, %v606
        %v608 = vrot.slane %v462, 4
        %v609 = vadd.f32 %v462, %v608
        %v610 = vrot.slane %v609, 2
        %v611 = vadd.f32 %v609, %v610
        %v612 = vrot.slane %v611, 1
        %v613 = vadd.f32 %v611, %v612
        %v614 = vrot.slane %v463, 4
        %v615 = vadd.f32 %v463, %v614
        %v616 = vrot.slane %v615, 2
        %v617 = vadd.f32 %v615, %v616
        %v618 = vrot.slane %v617, 1
        %v619 = vadd.f32 %v617, %v618
        %v620 = vrot.slane %v464, 4
        %v621 = vadd.f32 %v464, %v620
        %v622 = vrot.slane %v621, 2
        %v623 = vadd.f32 %v621, %v622
        %v624 = vrot.slane %v623, 1
        %v625 = vadd.f32 %v623, %v624
        %v626 = vrot.slane %v465, 4
        %v627 = vadd.f32 %v465, %v626
        %v628 = vrot.slane %v627, 2
        %v629 = vadd.f32 %v627, %v628
        %v630 = vrot.slane %v629, 1
        %v631 = vadd.f32 %v629, %v630
        %v632 = vrot.slane %v466, 4
        %v633 = vadd.f32 %v466, %v632
        %v634 = vrot.slane %v633, 2
        %v635 = vadd.f32 %v633, %v634
        %v636 = vrot.slane %v635, 1
        %v637 = vadd.f32 %v635, %v636
        %v638 = vrot.slane %v467, 4
        %v639 = vadd.f32 %v467, %v638
        %v640 = vrot.slane %v639, 2
        %v641 = vadd.f32 %v639, %v640
        %v642 = vrot.slane %v641, 1
        %v643 = vadd.f32 %v641, %v642
        %v644 = vrot.slane %v468, 4
        %v645 = vadd.f32 %v468, %v644
        %v646 = vrot.slane %v645, 2
        %v647 = vadd.f32 %v645, %v646
        %v648 = vrot.slane %v647, 1
        %v649 = vadd.f32 %v647, %v648
        %v650 = vrot.slane %v469, 4
        %v651 = vadd.f32 %v469, %v650
        %v652 = vrot.slane %v651, 2
        %v653 = vadd.f32 %v651, %v652
        %v654 = vrot.slane %v653, 1
        %v655 = vadd.f32 %v653, %v654
        %v656 = vrot.slane %v470, 4
        %v657 = vadd.f32 %v470, %v656
        %v658 = vrot.slane %v657, 2
        %v659 = vadd.f32 %v657, %v658
        %v660 = vrot.slane %v659, 1
        %v661 = vadd.f32 %v659, %v660
        %v662 = vrot.slane %v471, 4
        %v663 = vadd.f32 %v471, %v662
        %v664 = vrot.slane %v663, 2
        %v665 = vadd.f32 %v663, %v664
        %v666 = vrot.slane %v665, 1
        %v667 = vadd.f32 %v665, %v666
        %v700 = vrot.slane %v487, 6
        %v701 = vrot.slane %v493, 4
        %v702 = vrot.slane %v499, 2
        %v703 = vrot.slane %v511, 6
        %v704 = vrot.slane %v517, 4
        %v705 = vrot.slane %v523, 2
        %v706 = vrot.slane %v535, 6
        %v707 = vrot.slane %v541, 4
        %v708 = vrot.slane %v547, 2
        %v709 = vrot.slane %v559, 6
        %v710 = vrot.slane %v565, 4
        %v711 = vrot.slane %v571, 2
        %v712 = vrot.slane %v583, 6
        %v713 = vrot.slane %v589, 4
        %v714 = vrot.slane %v595, 2
        %v715 = vrot.slane %v607, 6
        %v716 = vrot.slane %v613, 4
        %v717 = vrot.slane %v619, 2
        %v718 = vrot.slane %v631, 6
        %v719 = vrot.slane %v637, 4
        %v720 = vrot.slane %v643, 2
        %v721 = vrot.slane %v655, 6
        %v722 = vrot.slane %v661, 4
        %v723 = vrot.slane %v667, 2
        %vm724 = vcmask 1041408
        %v725 = vsel %vm724, %v481, %v700
        %vm726 = vcmask 1045508
        %v727 = vsel %vm726, %v701, %v702
        %vm728 = vcmask 1043456
        %v729 = vsel %vm728, %v725, %v727
        %v730 = vsel %vm724, %v505, %v703
        %v731 = vsel %vm726, %v704, %v705
        %v732 = vsel %vm728, %v730, %v731
        %v733 = vsel %vm724, %v529, %v706
        %v734 = vsel %vm726, %v707, %v708
        %v735 = vsel %vm728, %v733, %v734
        %v736 = vsel %vm724, %v553, %v709
        %v737 = vsel %vm726, %v710, %v711
        %v738 = vsel %vm728, %v736, %v737
        %v739 = vsel %vm724, %v577, %v712
        %v740 = vsel %vm726, %v713, %v714
        %v741 = vsel %vm728, %v739, %v740
        %v742 = vsel %vm724, %v601, %v715
        %v743 = vsel %vm726, %v716, %v717
        %v744 = vsel %vm728, %v742, %v743
        %v745 = vsel %vm724, %v625, %v718
        %v746 = vsel %vm726, %v719, %v720
        %v747 = vsel %vm728, %v745, %v746
        %v748 = vsel %vm724, %v649, %v721
        %v749 = vsel %vm726, %v722, %v723
        %v750 = vsel %vm728, %v748, %v749
        %vm751 = vcmask 1044484
        %v752 = vsel %vm751, %v729, %v729
        %vm753 = vcmask 1046534
        %v754 = vsel %vm753, %v729, %v752
        %v755 = vrot.slane %v741, 7
        %vm756 = vcmask 1041409
        %v757 = vsel %vm756, %v755, %v754
        %vm758 = vcmask 1043459
        %v759 = vsel %vm758, %v755, %v757
        %vm760 = vcmask 1045509
        %v761 = vsel %vm760, %v755, %v759
        %vm762 = vcmask 1047559
        %v763 = vsel %vm762, %v755, %v761
        %v764 = vsel %vm751, %v732, %v732
        %v765 = vsel %vm753, %v732, %v764
        %v766 = vrot.slane %v744, 7
        %v767 = vsel %vm756, %v766, %v765
        %v768 = vsel %vm758, %v766, %v767
        %v769 = vsel %vm760, %v766, %v768
        %v770 = vsel %vm762, %v766, %v769
        %v771 = vsel %vm751, %v735, %v735
        %v772 = vsel %vm753, %v735, %v771
        %v773 = vrot.slane %v747, 7
        %v774 = vsel %vm756, %v773, %v772
        %v775 = vsel %vm758, %v773, %v774
        %v776 = vsel %vm760, %v773, %v775
        %v777 = vsel %vm762, %v773, %v776
        %v778 = vsel %vm751, %v738, %v738
        %v779 = vsel %vm753, %v738, %v778
        %v780 = vrot.slane %v750, 7
        %v781 = vsel %vm756, %v780, %v779
        %v782 = vsel %vm758, %v780, %v781
        %v783 = vsel %vm760, %v780, %v782
        %v784 = vsel %vm762, %v780, %v783
        %v789 = vadd.f32 %v472, %v763
        %v790 = vadd.f32 %v473, %v770
        %v791 = vadd.f32 %v474, %v777
        %v792 = vadd.f32 %v475, %v784
        %793 = vst [vmem:[#allocation2] sm:$0xff] %v789
        %794 = vst [vmem:[#allocation2 + $0x8] sm:$0xff] %v790
        %795 = vst [vmem:[#allocation2 + $0x10] sm:$0xff] %v791
        %796 = vst [vmem:[#allocation2 + $0x18] sm:$0xff] %v792
        // Predicated region
        $region65: #{tpu_custom_call.1} parent=39 // pred_check
          %p797 = pneg %p413
        $region66: #{tpu_custom_call.1} parent=39 // pred_check_branch
          %799 = sbr.rel (%p797) target = $region68
        $region67: #{tpu_custom_call.1} parent=39 // pred_region
          %v800 = vld [vmem:[#allocation2] sm:$0xff]
          %v801 = vld [vmem:[#allocation2 + $0x8] sm:$0xff]
          %v802 = vld [vmem:[#allocation2 + $0x10] sm:$0xff]
          %v803 = vld [vmem:[#allocation2 + $0x18] sm:$0xff]
          %808 = vst [vmem:[#allocation1] ss:$4 sm:$0xff] %v800
          %s809 = scalar_lea.vmem [#allocation1], 32
          %810 = vst [vmem:[%s809] ss:$4 sm:$0xff] %v801
          %v811 = vld.sshfl [vmem:[#allocation1] sm:$0xff pattern:$0x73625140]
          %v812 = vld.sshfl [vmem:[#allocation1 + $0x8] sm:$0xff pattern:$0x73625140]
          %v813 = vld.sshfl [vmem:[#allocation1 + $0x10] sm:$0xff pattern:$0x73625140]
          %v814 = vld.sshfl [vmem:[#allocation1 + $0x18] sm:$0xff pattern:$0x73625140]
          %v815 = vld.sshfl [vmem:[#allocation1 + $0x20] sm:$0xff pattern:$0x73625140]
          %v816 = vld.sshfl [vmem:[#allocation1 + $0x28] sm:$0xff pattern:$0x73625140]
          %v817 = vld.sshfl [vmem:[#allocation1 + $0x30] sm:$0xff pattern:$0x73625140]
          %v818 = vld.sshfl [vmem:[#allocation1 + $0x38] sm:$0xff pattern:$0x73625140]
          %819 = vst [vmem:[#allocation1] ss:$4 sm:$0xff] %v802
          %820 = vst [vmem:[%s809] ss:$4 sm:$0xff] %v803
          %v821 = vld.sshfl [vmem:[#allocation1] sm:$0xff pattern:$0x73625140]
          %v822 = vld.sshfl [vmem:[#allocation1 + $0x8] sm:$0xff pattern:$0x73625140]
          %v823 = vld.sshfl [vmem:[#allocation1 + $0x10] sm:$0xff pattern:$0x73625140]
          %v824 = vld.sshfl [vmem:[#allocation1 + $0x18] sm:$0xff pattern:$0x73625140]
          %v825 = vld.sshfl [vmem:[#allocation1 + $0x20] sm:$0xff pattern:$0x73625140]
          %v826 = vld.sshfl [vmem:[#allocation1 + $0x28] sm:$0xff pattern:$0x73625140]
          %v827 = vld.sshfl [vmem:[#allocation1 + $0x30] sm:$0xff pattern:$0x73625140]
          %v828 = vld.sshfl [vmem:[#allocation1 + $0x38] sm:$0xff pattern:$0x73625140]
          %v845 = vpack.c.bf16 %v811, %v811
          %v846 = vpack.c.bf16 %v812, %v812
          %v847 = vpack.c.bf16 %v813, %v813
          %v848 = vpack.c.bf16 %v814, %v814
          %v849 = vpack.c.bf16 %v815, %v815
          %v850 = vpack.c.bf16 %v816, %v816
          %v851 = vpack.c.bf16 %v817, %v817
          %v852 = vpack.c.bf16 %v818, %v818
          %v853 = vpack.c.bf16 %v821, %v821
          %v854 = vpack.c.bf16 %v822, %v822
          %v855 = vpack.c.bf16 %v823, %v823
          %v856 = vpack.c.bf16 %v824, %v824
          %v857 = vpack.c.bf16 %v825, %v825
          %v858 = vpack.c.bf16 %v826, %v826
          %v859 = vpack.c.bf16 %v827, %v827
          %v860 = vpack.c.bf16 %v828, %v828
          %v861 = vld [vmem:[%s337] sm:$0xff]
          %v862 = vld [vmem:[%s337 + $0x8] sm:$0xff]
          %v863 = vld [vmem:[%s337 + $0x10] sm:$0xff]
          %v864 = vld [vmem:[%s337 + $0x18] sm:$0xff]
          %v865 = vld [vmem:[%s337 + $0x20] sm:$0xff]
          %v866 = vld [vmem:[%s337 + $0x28] sm:$0xff]
          %v867 = vld [vmem:[%s337 + $0x30] sm:$0xff]
          %v868 = vld [vmem:[%s337 + $0x38] sm:$0xff]
          %v869 = vld [vmem:[%s337 + $0x40] sm:$0xff]
          %v870 = vld [vmem:[%s337 + $0x48] sm:$0xff]
          %v871 = vld [vmem:[%s337 + $0x50] sm:$0xff]
          %v872 = vld [vmem:[%s337 + $0x58] sm:$0xff]
          %v873 = vld [vmem:[%s337 + $0x60] sm:$0xff]
          %v874 = vld [vmem:[%s337 + $0x68] sm:$0xff]
          %v875 = vld [vmem:[%s337 + $0x70] sm:$0xff]
          %v876 = vld [vmem:[%s337 + $0x78] sm:$0xff]
          %v877 = vld [vmem:[%s337 + $0x80] sm:$0xff]
          %v878 = vld [vmem:[%s337 + $0x88] sm:$0xff]
          %v879 = vld [vmem:[%s337 + $0x90] sm:$0xff]
          %v880 = vld [vmem:[%s337 + $0x98] sm:$0xff]
          %v881 = vld [vmem:[%s337 + $0xa0] sm:$0xff]
          %v882 = vld [vmem:[%s337 + $0xa8] sm:$0xff]
          %v883 = vld [vmem:[%s337 + $0xb0] sm:$0xff]
          %v884 = vld [vmem:[%s337 + $0xb8] sm:$0xff]
          %v885 = vld [vmem:[%s337 + $0xc0] sm:$0xff]
          %v886 = vld [vmem:[%s337 + $0xc8] sm:$0xff]
          %v887 = vld [vmem:[%s337 + $0xd0] sm:$0xff]
          %v888 = vld [vmem:[%s337 + $0xd8] sm:$0xff]
          %v889 = vld [vmem:[%s337 + $0xe0] sm:$0xff]
          %v890 = vld [vmem:[%s337 + $0xe8] sm:$0xff]
          %v891 = vld [vmem:[%s337 + $0xf0] sm:$0xff]
          %v892 = vld [vmem:[%s337 + $0xf8] sm:$0xff]
          %v893 = vld [vmem:[%s337 + $0x100] sm:$0xff]
          %v894 = vld [vmem:[%s337 + $0x108] sm:$0xff]
          %v895 = vld [vmem:[%s337 + $0x110] sm:$0xff]
          %v896 = vld [vmem:[%s337 + $0x118] sm:$0xff]
          %v897 = vld [vmem:[%s337 + $0x120] sm:$0xff]
          %v898 = vld [vmem:[%s337 + $0x128] sm:$0xff]
          %v899 = vld [vmem:[%s337 + $0x130] sm:$0xff]
          %v900 = vld [vmem:[%s337 + $0x138] sm:$0xff]
          %v901 = vld [vmem:[%s337 + $0x140] sm:$0xff]
          %v902 = vld [vmem:[%s337 + $0x148] sm:$0xff]
          %v903 = vld [vmem:[%s337 + $0x150] sm:$0xff]
          %v904 = vld [vmem:[%s337 + $0x158] sm:$0xff]
          %v905 = vld [vmem:[%s337 + $0x160] sm:$0xff]
          %v906 = vld [vmem:[%s337 + $0x168] sm:$0xff]
          %v907 = vld [vmem:[%s337 + $0x170] sm:$0xff]
          %v908 = vld [vmem:[%s337 + $0x178] sm:$0xff]
          %v909 = vld [vmem:[%s337 + $0x180] sm:$0xff]
          %v910 = vld [vmem:[%s337 + $0x188] sm:$0xff]
          %v911 = vld [vmem:[%s337 + $0x190] sm:$0xff]
          %v912 = vld [vmem:[%s337 + $0x198] sm:$0xff]
          %v913 = vld [vmem:[%s337 + $0x1a0] sm:$0xff]
          %v914 = vld [vmem:[%s337 + $0x1a8] sm:$0xff]
          %v915 = vld [vmem:[%s337 + $0x1b0] sm:$0xff]
          %v916 = vld [vmem:[%s337 + $0x1b8] sm:$0xff]
          %v917 = vld [vmem:[%s337 + $0x1c0] sm:$0xff]
          %v918 = vld [vmem:[%s337 + $0x1c8] sm:$0xff]
          %v919 = vld [vmem:[%s337 + $0x1d0] sm:$0xff]
          %v920 = vld [vmem:[%s337 + $0x1d8] sm:$0xff]
          %v921 = vld [vmem:[%s337 + $0x1e0] sm:$0xff]
          %v922 = vld [vmem:[%s337 + $0x1e8] sm:$0xff]
          %v923 = vld [vmem:[%s337 + $0x1f0] sm:$0xff]
          %v924 = vld [vmem:[%s337 + $0x1f8] sm:$0xff]
          %v925 = vld [vmem:[%s337 + $0x200] sm:$0xff]
          %v926 = vld [vmem:[%s337 + $0x208] sm:$0xff]
          %v927 = vld [vmem:[%s337 + $0x210] sm:$0xff]
          %v928 = vld [vmem:[%s337 + $0x218] sm:$0xff]
          %v929 = vld [vmem:[%s337 + $0x220] sm:$0xff]
          %v930 = vld [vmem:[%s337 + $0x228] sm:$0xff]
          %v931 = vld [vmem:[%s337 + $0x230] sm:$0xff]
          %v932 = vld [vmem:[%s337 + $0x238] sm:$0xff]
          %v933 = vld [vmem:[%s337 + $0x240] sm:$0xff]
          %v934 = vld [vmem:[%s337 + $0x248] sm:$0xff]
          %v935 = vld [vmem:[%s337 + $0x250] sm:$0xff]
          %v936 = vld [vmem:[%s337 + $0x258] sm:$0xff]
          %v937 = vld [vmem:[%s337 + $0x260] sm:$0xff]
          %v938 = vld [vmem:[%s337 + $0x268] sm:$0xff]
          %v939 = vld [vmem:[%s337 + $0x270] sm:$0xff]
          %v940 = vld [vmem:[%s337 + $0x278] sm:$0xff]
          %v941 = vld [vmem:[%s337 + $0x280] sm:$0xff]
          %v942 = vld [vmem:[%s337 + $0x288] sm:$0xff]
          %v943 = vld [vmem:[%s337 + $0x290] sm:$0xff]
          %v944 = vld [vmem:[%s337 + $0x298] sm:$0xff]
          %v945 = vld [vmem:[%s337 + $0x2a0] sm:$0xff]
          %v946 = vld [vmem:[%s337 + $0x2a8] sm:$0xff]
          %v947 = vld [vmem:[%s337 + $0x2b0] sm:$0xff]
          %v948 = vld [vmem:[%s337 + $0x2b8] sm:$0xff]
          %v949 = vld [vmem:[%s337 + $0x2c0] sm:$0xff]
          %v950 = vld [vmem:[%s337 + $0x2c8] sm:$0xff]
          %v951 = vld [vmem:[%s337 + $0x2d0] sm:$0xff]
          %v952 = vld [vmem:[%s337 + $0x2d8] sm:$0xff]
          %v953 = vld [vmem:[%s337 + $0x2e0] sm:$0xff]
          %v954 = vld [vmem:[%s337 + $0x2e8] sm:$0xff]
          %v955 = vld [vmem:[%s337 + $0x2f0] sm:$0xff]
          %v956 = vld [vmem:[%s337 + $0x2f8] sm:$0xff]
          %v957 = vld [vmem:[%s337 + $0x300] sm:$0xff]
          %v958 = vld [vmem:[%s337 + $0x308] sm:$0xff]
          %v959 = vld [vmem:[%s337 + $0x310] sm:$0xff]
          %v960 = vld [vmem:[%s337 + $0x318] sm:$0xff]
          %v961 = vld [vmem:[%s337 + $0x320] sm:$0xff]
          %v962 = vld [vmem:[%s337 + $0x328] sm:$0xff]
          %v963 = vld [vmem:[%s337 + $0x330] sm:$0xff]
          %v964 = vld [vmem:[%s337 + $0x338] sm:$0xff]
          %v965 = vld [vmem:[%s337 + $0x340] sm:$0xff]
          %v966 = vld [vmem:[%s337 + $0x348] sm:$0xff]
          %v967 = vld [vmem:[%s337 + $0x350] sm:$0xff]
          %v968 = vld [vmem:[%s337 + $0x358] sm:$0xff]
          %v969 = vld [vmem:[%s337 + $0x360] sm:$0xff]
          %v970 = vld [vmem:[%s337 + $0x368] sm:$0xff]
          %v971 = vld [vmem:[%s337 + $0x370] sm:$0xff]
          %v972 = vld [vmem:[%s337 + $0x378] sm:$0xff]
          %v973 = vld [vmem:[%s337 + $0x380] sm:$0xff]
          %v974 = vld [vmem:[%s337 + $0x388] sm:$0xff]
          %v975 = vld [vmem:[%s337 + $0x390] sm:$0xff]
          %v976 = vld [vmem:[%s337 + $0x398] sm:$0xff]
          %v977 = vld [vmem:[%s337 + $0x3a0] sm:$0xff]
          %v978 = vld [vmem:[%s337 + $0x3a8] sm:$0xff]
          %v979 = vld [vmem:[%s337 + $0x3b0] sm:$0xff]
          %v980 = vld [vmem:[%s337 + $0x3b8] sm:$0xff]
          %v981 = vld [vmem:[%s337 + $0x3c0] sm:$0xff]
          %v982 = vld [vmem:[%s337 + $0x3c8] sm:$0xff]
          %v983 = vld [vmem:[%s337 + $0x3d0] sm:$0xff]
          %v984 = vld [vmem:[%s337 + $0x3d8] sm:$0xff]
          %v985 = vld [vmem:[%s337 + $0x3e0] sm:$0xff]
          %v986 = vld [vmem:[%s337 + $0x3e8] sm:$0xff]
          %v987 = vld [vmem:[%s337 + $0x3f0] sm:$0xff]
          %v988 = vld [vmem:[%s337 + $0x3f8] sm:$0xff]
          %v989 = vld [vmem:[%s337 + $0x400] sm:$0xff]
          %v990 = vld [vmem:[%s337 + $0x408] sm:$0xff]
          %v991 = vld [vmem:[%s337 + $0x410] sm:$0xff]
          %v992 = vld [vmem:[%s337 + $0x418] sm:$0xff]
          %v993 = vld [vmem:[%s337 + $0x420] sm:$0xff]
          %v994 = vld [vmem:[%s337 + $0x428] sm:$0xff]
          %v995 = vld [vmem:[%s337 + $0x430] sm:$0xff]
          %v996 = vld [vmem:[%s337 + $0x438] sm:$0xff]
          %v997 = vld [vmem:[%s337 + $0x440] sm:$0xff]
          %v998 = vld [vmem:[%s337 + $0x448] sm:$0xff]
          %v999 = vld [vmem:[%s337 + $0x450] sm:$0xff]
          %v1000 = vld [vmem:[%s337 + $0x458] sm:$0xff]
          %v1001 = vld [vmem:[%s337 + $0x460] sm:$0xff]
          %v1002 = vld [vmem:[%s337 + $0x468] sm:$0xff]
          %v1003 = vld [vmem:[%s337 + $0x470] sm:$0xff]
          %v1004 = vld [vmem:[%s337 + $0x478] sm:$0xff]
          %v1005 = vld [vmem:[%s337 + $0x480] sm:$0xff]
          %v1006 = vld [vmem:[%s337 + $0x488] sm:$0xff]
          %v1007 = vld [vmem:[%s337 + $0x490] sm:$0xff]
          %v1008 = vld [vmem:[%s337 + $0x498] sm:$0xff]
          %v1009 = vld [vmem:[%s337 + $0x4a0] sm:$0xff]
          %v1010 = vld [vmem:[%s337 + $0x4a8] sm:$0xff]
          %v1011 = vld [vmem:[%s337 + $0x4b0] sm:$0xff]
          %v1012 = vld [vmem:[%s337 + $0x4b8] sm:$0xff]
          %v1013 = vld [vmem:[%s337 + $0x4c0] sm:$0xff]
          %v1014 = vld [vmem:[%s337 + $0x4c8] sm:$0xff]
          %v1015 = vld [vmem:[%s337 + $0x4d0] sm:$0xff]
          %v1016 = vld [vmem:[%s337 + $0x4d8] sm:$0xff]
          %v1017 = vld [vmem:[%s337 + $0x4e0] sm:$0xff]
          %v1018 = vld [vmem:[%s337 + $0x4e8] sm:$0xff]
          %v1019 = vld [vmem:[%s337 + $0x4f0] sm:$0xff]
          %v1020 = vld [vmem:[%s337 + $0x4f8] sm:$0xff]
          %v1021 = vld [vmem:[%s337 + $0x500] sm:$0xff]
          %v1022 = vld [vmem:[%s337 + $0x508] sm:$0xff]
          %v1023 = vld [vmem:[%s337 + $0x510] sm:$0xff]
          %v1024 = vld [vmem:[%s337 + $0x518] sm:$0xff]
          %v1025 = vld [vmem:[%s337 + $0x520] sm:$0xff]
          %v1026 = vld [vmem:[%s337 + $0x528] sm:$0xff]
          %v1027 = vld [vmem:[%s337 + $0x530] sm:$0xff]
          %v1028 = vld [vmem:[%s337 + $0x538] sm:$0xff]
          %v1029 = vld [vmem:[%s337 + $0x540] sm:$0xff]
          %v1030 = vld [vmem:[%s337 + $0x548] sm:$0xff]
          %v1031 = vld [vmem:[%s337 + $0x550] sm:$0xff]
          %v1032 = vld [vmem:[%s337 + $0x558] sm:$0xff]
          %v1033 = vld [vmem:[%s337 + $0x560] sm:$0xff]
          %v1034 = vld [vmem:[%s337 + $0x568] sm:$0xff]
          %v1035 = vld [vmem:[%s337 + $0x570] sm:$0xff]
          %v1036 = vld [vmem:[%s337 + $0x578] sm:$0xff]
          %v1037 = vld [vmem:[%s337 + $0x580] sm:$0xff]
          %v1038 = vld [vmem:[%s337 + $0x588] sm:$0xff]
          %v1039 = vld [vmem:[%s337 + $0x590] sm:$0xff]
          %v1040 = vld [vmem:[%s337 + $0x598] sm:$0xff]
          %v1041 = vld [vmem:[%s337 + $0x5a0] sm:$0xff]
          %v1042 = vld [vmem:[%s337 + $0x5a8] sm:$0xff]
          %v1043 = vld [vmem:[%s337 + $0x5b0] sm:$0xff]
          %v1044 = vld [vmem:[%s337 + $0x5b8] sm:$0xff]
          %v1045 = vld [vmem:[%s337 + $0x5c0] sm:$0xff]
          %v1046 = vld [vmem:[%s337 + $0x5c8] sm:$0xff]
          %v1047 = vld [vmem:[%s337 + $0x5d0] sm:$0xff]
          %v1048 = vld [vmem:[%s337 + $0x5d8] sm:$0xff]
          %v1049 = vld [vmem:[%s337 + $0x5e0] sm:$0xff]
          %v1050 = vld [vmem:[%s337 + $0x5e8] sm:$0xff]
          %v1051 = vld [vmem:[%s337 + $0x5f0] sm:$0xff]
          %v1052 = vld [vmem:[%s337 + $0x5f8] sm:$0xff]
          %v1053 = vld [vmem:[%s337 + $0x600] sm:$0xff]
          %v1054 = vld [vmem:[%s337 + $0x608] sm:$0xff]
          %v1055 = vld [vmem:[%s337 + $0x610] sm:$0xff]
          %v1056 = vld [vmem:[%s337 + $0x618] sm:$0xff]
          %v1057 = vld [vmem:[%s337 + $0x620] sm:$0xff]
          %v1058 = vld [vmem:[%s337 + $0x628] sm:$0xff]
          %v1059 = vld [vmem:[%s337 + $0x630] sm:$0xff]
          %v1060 = vld [vmem:[%s337 + $0x638] sm:$0xff]
          %v1061 = vld [vmem:[%s337 + $0x640] sm:$0xff]
          %v1062 = vld [vmem:[%s337 + $0x648] sm:$0xff]
          %v1063 = vld [vmem:[%s337 + $0x650] sm:$0xff]
          %v1064 = vld [vmem:[%s337 + $0x658] sm:$0xff]
          %v1065 = vld [vmem:[%s337 + $0x660] sm:$0xff]
          %v1066 = vld [vmem:[%s337 + $0x668] sm:$0xff]
          %v1067 = vld [vmem:[%s337 + $0x670] sm:$0xff]
          %v1068 = vld [vmem:[%s337 + $0x678] sm:$0xff]
          %v1069 = vld [vmem:[%s337 + $0x680] sm:$0xff]
          %v1070 = vld [vmem:[%s337 + $0x688] sm:$0xff]
          %v1071 = vld [vmem:[%s337 + $0x690] sm:$0xff]
          %v1072 = vld [vmem:[%s337 + $0x698] sm:$0xff]
          %v1073 = vld [vmem:[%s337 + $0x6a0] sm:$0xff]
          %v1074 = vld [vmem:[%s337 + $0x6a8] sm:$0xff]
          %v1075 = vld [vmem:[%s337 + $0x6b0] sm:$0xff]
          %v1076 = vld [vmem:[%s337 + $0x6b8] sm:$0xff]
          %v1077 = vld [vmem:[%s337 + $0x6c0] sm:$0xff]
          %v1078 = vld [vmem:[%s337 + $0x6c8] sm:$0xff]
          %v1079 = vld [vmem:[%s337 + $0x6d0] sm:$0xff]
          %v1080 = vld [vmem:[%s337 + $0x6d8] sm:$0xff]
          %v1081 = vld [vmem:[%s337 + $0x6e0] sm:$0xff]
          %v1082 = vld [vmem:[%s337 + $0x6e8] sm:$0xff]
          %v1083 = vld [vmem:[%s337 + $0x6f0] sm:$0xff]
          %v1084 = vld [vmem:[%s337 + $0x6f8] sm:$0xff]
          %v1085 = vld [vmem:[%s337 + $0x700] sm:$0xff]
          %v1086 = vld [vmem:[%s337 + $0x708] sm:$0xff]
          %v1087 = vld [vmem:[%s337 + $0x710] sm:$0xff]
          %v1088 = vld [vmem:[%s337 + $0x718] sm:$0xff]
          %v1089 = vld [vmem:[%s337 + $0x720] sm:$0xff]
          %v1090 = vld [vmem:[%s337 + $0x728] sm:$0xff]
          %v1091 = vld [vmem:[%s337 + $0x730] sm:$0xff]
          %v1092 = vld [vmem:[%s337 + $0x738] sm:$0xff]
          %v1093 = vld [vmem:[%s337 + $0x740] sm:$0xff]
          %v1094 = vld [vmem:[%s337 + $0x748] sm:$0xff]
          %v1095 = vld [vmem:[%s337 + $0x750] sm:$0xff]
          %v1096 = vld [vmem:[%s337 + $0x758] sm:$0xff]
          %v1097 = vld [vmem:[%s337 + $0x760] sm:$0xff]
          %v1098 = vld [vmem:[%s337 + $0x768] sm:$0xff]
          %v1099 = vld [vmem:[%s337 + $0x770] sm:$0xff]
          %v1100 = vld [vmem:[%s337 + $0x778] sm:$0xff]
          %v1101 = vld [vmem:[%s337 + $0x780] sm:$0xff]
          %v1102 = vld [vmem:[%s337 + $0x788] sm:$0xff]
          %v1103 = vld [vmem:[%s337 + $0x790] sm:$0xff]
          %v1104 = vld [vmem:[%s337 + $0x798] sm:$0xff]
          %v1105 = vld [vmem:[%s337 + $0x7a0] sm:$0xff]
          %v1106 = vld [vmem:[%s337 + $0x7a8] sm:$0xff]
          %v1107 = vld [vmem:[%s337 + $0x7b0] sm:$0xff]
          %v1108 = vld [vmem:[%s337 + $0x7b8] sm:$0xff]
          %v1109 = vld [vmem:[%s337 + $0x7c0] sm:$0xff]
          %v1110 = vld [vmem:[%s337 + $0x7c8] sm:$0xff]
          %v1111 = vld [vmem:[%s337 + $0x7d0] sm:$0xff]
          %v1112 = vld [vmem:[%s337 + $0x7d8] sm:$0xff]
          %v1113 = vld [vmem:[%s337 + $0x7e0] sm:$0xff]
          %v1114 = vld [vmem:[%s337 + $0x7e8] sm:$0xff]
          %v1115 = vld [vmem:[%s337 + $0x7f0] sm:$0xff]
          %v1116 = vld [vmem:[%s337 + $0x7f8] sm:$0xff]
          %v1117 = vld [vmem:[%s347] sm:$0x3]
          %v1119 = vperm.slane %v1117, 0
          %v1120 = vperm.slane %v1117, 1
          %v1379 = vunpack.c.l.b16 %v861
          %v1380 = vunpack.c.h.b16 %v861
          %v1381 = vunpack.c.l.b16 %v862
          %v1382 = vunpack.c.h.b16 %v862
          %v1383 = vunpack.c.l.b16 %v863
          %v1384 = vunpack.c.h.b16 %v863
          %v1385 = vunpack.c.l.b16 %v864
          %v1386 = vunpack.c.h.b16 %v864
          %v1387 = vunpack.c.l.b16 %v865
          %v1388 = vunpack.c.h.b16 %v865
          %v1389 = vunpack.c.l.b16 %v866
          %v1390 = vunpack.c.h.b16 %v866
          %v1391 = vunpack.c.l.b16 %v867
          %v1392 = vunpack.c.h.b16 %v867
          %v1393 = vunpack.c.l.b16 %v868
          %v1394 = vunpack.c.h.b16 %v868
          %v1395 = vunpack.c.l.b16 %v869
          %v1396 = vunpack.c.h.b16 %v869
          %v1397 = vunpack.c.l.b16 %v870
          %v1398 = vunpack.c.h.b16 %v870
          %v1399 = vunpack.c.l.b16 %v871
          %v1400 = vunpack.c.h.b16 %v871
          %v1401 = vunpack.c.l.b16 %v872
          %v1402 = vunpack.c.h.b16 %v872
          %v1403 = vunpack.c.l.b16 %v873
          %v1404 = vunpack.c.h.b16 %v873
          %v1405 = vunpack.c.l.b16 %v874
          %v1406 = vunpack.c.h.b16 %v874
          %v1407 = vunpack.c.l.b16 %v875
          %v1408 = vunpack.c.h.b16 %v875
          %v1409 = vunpack.c.l.b16 %v876
          %v1410 = vunpack.c.h.b16 %v876
          %v1411 = vunpack.c.l.b16 %v877
          %v1412 = vunpack.c.h.b16 %v877
          %v1413 = vunpack.c.l.b16 %v878
          %v1414 = vunpack.c.h.b16 %v878
          %v1415 = vunpack.c.l.b16 %v879
          %v1416 = vunpack.c.h.b16 %v879
          %v1417 = vunpack.c.l.b16 %v880
          %v1418 = vunpack.c.h.b16 %v880
          %v1419 = vunpack.c.l.b16 %v881
          %v1420 = vunpack.c.h.b16 %v881
          %v1421 = vunpack.c.l.b16 %v882
          %v1422 = vunpack.c.h.b16 %v882
          %v1423 = vunpack.c.l.b16 %v883
          %v1424 = vunpack.c.h.b16 %v883
          %v1425 = vunpack.c.l.b16 %v884
          %v1426 = vunpack.c.h.b16 %v884
          %v1427 = vunpack.c.l.b16 %v885
          %v1428 = vunpack.c.h.b16 %v885
          %v1429 = vunpack.c.l.b16 %v886
          %v1430 = vunpack.c.h.b16 %v886
          %v1431 = vunpack.c.l.b16 %v887
          %v1432 = vunpack.c.h.b16 %v887
          %v1433 = vunpack.c.l.b16 %v888
          %v1434 = vunpack.c.h.b16 %v888
          %v1435 = vunpack.c.l.b16 %v889
          %v1436 = vunpack.c.h.b16 %v889
          %v1437 = vunpack.c.l.b16 %v890
          %v1438 = vunpack.c.h.b16 %v890
          %v1439 = vunpack.c.l.b16 %v891
          %v1440 = vunpack.c.h.b16 %v891
          %v1441 = vunpack.c.l.b16 %v892
          %v1442 = vunpack.c.h.b16 %v892
          %v1443 = vunpack.c.l.b16 %v893
          %v1444 = vunpack.c.h.b16 %v893
          %v1445 = vunpack.c.l.b16 %v894
          %v1446 = vunpack.c.h.b16 %v894
          %v1447 = vunpack.c.l.b16 %v895
          %v1448 = vunpack.c.h.b16 %v895
          %v1449 = vunpack.c.l.b16 %v896
          %v1450 = vunpack.c.h.b16 %v896
          %v1451 = vunpack.c.l.b16 %v897
          %v1452 = vunpack.c.h.b16 %v897
          %v1453 = vunpack.c.l.b16 %v898
          %v1454 = vunpack.c.h.b16 %v898
          %v1455 = vunpack.c.l.b16 %v899
          %v1456 = vunpack.c.h.b16 %v899
          %v1457 = vunpack.c.l.b16 %v900
          %v1458 = vunpack.c.h.b16 %v900
          %v1459 = vunpack.c.l.b16 %v901
          %v1460 = vunpack.c.h.b16 %v901
          %v1461 = vunpack.c.l.b16 %v902
          %v1462 = vunpack.c.h.b16 %v902
          %v1463 = vunpack.c.l.b16 %v903
          %v1464 = vunpack.c.h.b16 %v903
          %v1465 = vunpack.c.l.b16 %v904
          %v1466 = vunpack.c.h.b16 %v904
          %v1467 = vunpack.c.l.b16 %v905
          %v1468 = vunpack.c.h.b16 %v905
          %v1469 = vunpack.c.l.b16 %v906
          %v1470 = vunpack.c.h.b16 %v906
          %v1471 = vunpack.c.l.b16 %v907
          %v1472 = vunpack.c.h.b16 %v907
          %v1473 = vunpack.c.l.b16 %v908
          %v1474 = vunpack.c.h.b16 %v908
          %v1475 = vunpack.c.l.b16 %v909
          %v1476 = vunpack.c.h.b16 %v909
          %v1477 = vunpack.c.l.b16 %v910
          %v1478 = vunpack.c.h.b16 %v910
          %v1479 = vunpack.c.l.b16 %v911
          %v1480 = vunpack.c.h.b16 %v911
          %v1481 = vunpack.c.l.b16 %v912
          %v1482 = vunpack.c.h.b16 %v912
          %v1483 = vunpack.c.l.b16 %v913
          %v1484 = vunpack.c.h.b16 %v913
          %v1485 = vunpack.c.l.b16 %v914
          %v1486 = vunpack.c.h.b16 %v914
          %v1487 = vunpack.c.l.b16 %v915
          %v1488 = vunpack.c.h.b16 %v915
          %v1489 = vunpack.c.l.b16 %v916
          %v1490 = vunpack.c.h.b16 %v916
          %v1491 = vunpack.c.l.b16 %v917
          %v1492 = vunpack.c.h.b16 %v917
          %v1493 = vunpack.c.l.b16 %v918
          %v1494 = vunpack.c.h.b16 %v918
          %v1495 = vunpack.c.l.b16 %v919
          %v1496 = vunpack.c.h.b16 %v919
          %v1497 = vunpack.c.l.b16 %v920
          %v1498 = vunpack.c.h.b16 %v920
          %v1499 = vunpack.c.l.b16 %v921
          %v1500 = vunpack.c.h.b16 %v921
          %v1501 = vunpack.c.l.b16 %v922
          %v1502 = vunpack.c.h.b16 %v922
          %v1503 = vunpack.c.l.b16 %v923
          %v1504 = vunpack.c.h.b16 %v923
          %v1505 = vunpack.c.l.b16 %v924
          %v1506 = vunpack.c.h.b16 %v924
          %v1507 = vunpack.c.l.b16 %v925
          %v1508 = vunpack.c.h.b16 %v925
          %v1509 = vunpack.c.l.b16 %v926
          %v1510 = vunpack.c.h.b16 %v926
          %v1511 = vunpack.c.l.b16 %v927
          %v1512 = vunpack.c.h.b16 %v927
          %v1513 = vunpack.c.l.b16 %v928
          %v1514 = vunpack.c.h.b16 %v928
          %v1515 = vunpack.c.l.b16 %v929
          %v1516 = vunpack.c.h.b16 %v929
          %v1517 = vunpack.c.l.b16 %v930
          %v1518 = vunpack.c.h.b16 %v930
          %v1519 = vunpack.c.l.b16 %v931
          %v1520 = vunpack.c.h.b16 %v931
          %v1521 = vunpack.c.l.b16 %v932
          %v1522 = vunpack.c.h.b16 %v932
          %v1523 = vunpack.c.l.b16 %v933
          %v1524 = vunpack.c.h.b16 %v933
          %v1525 = vunpack.c.l.b16 %v934
          %v1526 = vunpack.c.h.b16 %v934
          %v1527 = vunpack.c.l.b16 %v935
          %v1528 = vunpack.c.h.b16 %v935
          %v1529 = vunpack.c.l.b16 %v936
          %v1530 = vunpack.c.h.b16 %v936
          %v1531 = vunpack.c.l.b16 %v937
          %v1532 = vunpack.c.h.b16 %v937
          %v1533 = vunpack.c.l.b16 %v938
          %v1534 = vunpack.c.h.b16 %v938
          %v1535 = vunpack.c.l.b16 %v939
          %v1536 = vunpack.c.h.b16 %v939
          %v1537 = vunpack.c.l.b16 %v940
          %v1538 = vunpack.c.h.b16 %v940
          %v1539 = vunpack.c.l.b16 %v941
          %v1540 = vunpack.c.h.b16 %v941
          %v1541 = vunpack.c.l.b16 %v942
          %v1542 = vunpack.c.h.b16 %v942
          %v1543 = vunpack.c.l.b16 %v943
          %v1544 = vunpack.c.h.b16 %v943
          %v1545 = vunpack.c.l.b16 %v944
          %v1546 = vunpack.c.h.b16 %v944
          %v1547 = vunpack.c.l.b16 %v945
          %v1548 = vunpack.c.h.b16 %v945
          %v1549 = vunpack.c.l.b16 %v946
          %v1550 = vunpack.c.h.b16 %v946
          %v1551 = vunpack.c.l.b16 %v947
          %v1552 = vunpack.c.h.b16 %v947
          %v1553 = vunpack.c.l.b16 %v948
          %v1554 = vunpack.c.h.b16 %v948
          %v1555 = vunpack.c.l.b16 %v949
          %v1556 = vunpack.c.h.b16 %v949
          %v1557 = vunpack.c.l.b16 %v950
          %v1558 = vunpack.c.h.b16 %v950
          %v1559 = vunpack.c.l.b16 %v951
          %v1560 = vunpack.c.h.b16 %v951
          %v1561 = vunpack.c.l.b16 %v952
          %v1562 = vunpack.c.h.b16 %v952
          %v1563 = vunpack.c.l.b16 %v953
          %v1564 = vunpack.c.h.b16 %v953
          %v1565 = vunpack.c.l.b16 %v954
          %v1566 = vunpack.c.h.b16 %v954
          %v1567 = vunpack.c.l.b16 %v955
          %v1568 = vunpack.c.h.b16 %v955
          %v1569 = vunpack.c.l.b16 %v956
          %v1570 = vunpack.c.h.b16 %v956
          %v1571 = vunpack.c.l.b16 %v957
          %v1572 = vunpack.c.h.b16 %v957
          %v1573 = vunpack.c.l.b16 %v958
          %v1574 = vunpack.c.h.b16 %v958
          %v1575 = vunpack.c.l.b16 %v959
          %v1576 = vunpack.c.h.b16 %v959
          %v1577 = vunpack.c.l.b16 %v960
          %v1578 = vunpack.c.h.b16 %v960
          %v1579 = vunpack.c.l.b16 %v961
          %v1580 = vunpack.c.h.b16 %v961
          %v1581 = vunpack.c.l.b16 %v962
          %v1582 = vunpack.c.h.b16 %v962
          %v1583 = vunpack.c.l.b16 %v963
          %v1584 = vunpack.c.h.b16 %v963
          %v1585 = vunpack.c.l.b16 %v964
          %v1586 = vunpack.c.h.b16 %v964
          %v1587 = vunpack.c.l.b16 %v965
          %v1588 = vunpack.c.h.b16 %v965
          %v1589 = vunpack.c.l.b16 %v966
          %v1590 = vunpack.c.h.b16 %v966
          %v1591 = vunpack.c.l.b16 %v967
          %v1592 = vunpack.c.h.b16 %v967
          %v1593 = vunpack.c.l.b16 %v968
          %v1594 = vunpack.c.h.b16 %v968
          %v1595 = vunpack.c.l.b16 %v969
          %v1596 = vunpack.c.h.b16 %v969
          %v1597 = vunpack.c.l.b16 %v970
          %v1598 = vunpack.c.h.b16 %v970
          %v1599 = vunpack.c.l.b16 %v971
          %v1600 = vunpack.c.h.b16 %v971
          %v1601 = vunpack.c.l.b16 %v972
          %v1602 = vunpack.c.h.b16 %v972
          %v1603 = vunpack.c.l.b16 %v973
          %v1604 = vunpack.c.h.b16 %v973
          %v1605 = vunpack.c.l.b16 %v974
          %v1606 = vunpack.c.h.b16 %v974
          %v1607 = vunpack.c.l.b16 %v975
          %v1608 = vunpack.c.h.b16 %v975
          %v1609 = vunpack.c.l.b16 %v976
          %v1610 = vunpack.c.h.b16 %v976
          %v1611 = vunpack.c.l.b16 %v977
          %v1612 = vunpack.c.h.b16 %v977
          %v1613 = vunpack.c.l.b16 %v978
          %v1614 = vunpack.c.h.b16 %v978
          %v1615 = vunpack.c.l.b16 %v979
          %v1616 = vunpack.c.h.b16 %v979
          %v1617 = vunpack.c.l.b16 %v980
          %v1618 = vunpack.c.h.b16 %v980
          %v1619 = vunpack.c.l.b16 %v981
          %v1620 = vunpack.c.h.b16 %v981
          %v1621 = vunpack.c.l.b16 %v982
          %v1622 = vunpack.c.h.b16 %v982
          %v1623 = vunpack.c.l.b16 %v983
          %v1624 = vunpack.c.h.b16 %v983
          %v1625 = vunpack.c.l.b16 %v984
          %v1626 = vunpack.c.h.b16 %v984
          %v1627 = vunpack.c.l.b16 %v985
          %v1628 = vunpack.c.h.b16 %v985
          %v1629 = vunpack.c.l.b16 %v986
          %v1630 = vunpack.c.h.b16 %v986
          %v1631 = vunpack.c.l.b16 %v987
          %v1632 = vunpack.c.h.b16 %v987
          %v1633 = vunpack.c.l.b16 %v988
          %v1634 = vunpack.c.h.b16 %v988
          %v1635 = vunpack.c.l.b16 %v989
          %v1636 = vunpack.c.h.b16 %v989
          %v1637 = vunpack.c.l.b16 %v990
          %v1638 = vunpack.c.h.b16 %v990
          %v1639 = vunpack.c.l.b16 %v991
          %v1640 = vunpack.c.h.b16 %v991
          %v1641 = vunpack.c.l.b16 %v992
          %v1642 = vunpack.c.h.b16 %v992
          %v1643 = vunpack.c.l.b16 %v993
          %v1644 = vunpack.c.h.b16 %v993
          %v1645 = vunpack.c.l.b16 %v994
          %v1646 = vunpack.c.h.b16 %v994
          %v1647 = vunpack.c.l.b16 %v995
          %v1648 = vunpack.c.h.b16 %v995
          %v1649 = vunpack.c.l.b16 %v996
          %v1650 = vunpack.c.h.b16 %v996
          %v1651 = vunpack.c.l.b16 %v997
          %v1652 = vunpack.c.h.b16 %v997
          %v1653 = vunpack.c.l.b16 %v998
          %v1654 = vunpack.c.h.b16 %v998
          %v1655 = vunpack.c.l.b16 %v999
          %v1656 = vunpack.c.h.b16 %v999
          %v1657 = vunpack.c.l.b16 %v1000
          %v1658 = vunpack.c.h.b16 %v1000
          %v1659 = vunpack.c.l.b16 %v1001
          %v1660 = vunpack.c.h.b16 %v1001
          %v1661 = vunpack.c.l.b16 %v1002
          %v1662 = vunpack.c.h.b16 %v1002
          %v1663 = vunpack.c.l.b16 %v1003
          %v1664 = vunpack.c.h.b16 %v1003
          %v1665 = vunpack.c.l.b16 %v1004
          %v1666 = vunpack.c.h.b16 %v1004
          %v1667 = vunpack.c.l.b16 %v1005
          %v1668 = vunpack.c.h.b16 %v1005
          %v1669 = vunpack.c.l.b16 %v1006
          %v1670 = vunpack.c.h.b16 %v1006
          %v1671 = vunpack.c.l.b16 %v1007
          %v1672 = vunpack.c.h.b16 %v1007
          %v1673 = vunpack.c.l.b16 %v1008
          %v1674 = vunpack.c.h.b16 %v1008
          %v1675 = vunpack.c.l.b16 %v1009
          %v1676 = vunpack.c.h.b16 %v1009
          %v1677 = vunpack.c.l.b16 %v1010
          %v1678 = vunpack.c.h.b16 %v1010
          %v1679 = vunpack.c.l.b16 %v1011
          %v1680 = vunpack.c.h.b16 %v1011
          %v1681 = vunpack.c.l.b16 %v1012
          %v1682 = vunpack.c.h.b16 %v1012
          %v1683 = vunpack.c.l.b16 %v1013
          %v1684 = vunpack.c.h.b16 %v1013
          %v1685 = vunpack.c.l.b16 %v1014
          %v1686 = vunpack.c.h.b16 %v1014
          %v1687 = vunpack.c.l.b16 %v1015
          %v1688 = vunpack.c.h.b16 %v1015
          %v1689 = vunpack.c.l.b16 %v1016
          %v1690 = vunpack.c.h.b16 %v1016
          %v1691 = vunpack.c.l.b16 %v1017
          %v1692 = vunpack.c.h.b16 %v1017
          %v1693 = vunpack.c.l.b16 %v1018
          %v1694 = vunpack.c.h.b16 %v1018
          %v1695 = vunpack.c.l.b16 %v1019
          %v1696 = vunpack.c.h.b16 %v1019
          %v1697 = vunpack.c.l.b16 %v1020
          %v1698 = vunpack.c.h.b16 %v1020
          %v1699 = vunpack.c.l.b16 %v1021
          %v1700 = vunpack.c.h.b16 %v1021
          %v1701 = vunpack.c.l.b16 %v1022
          %v1702 = vunpack.c.h.b16 %v1022
          %v1703 = vunpack.c.l.b16 %v1023
          %v1704 = vunpack.c.h.b16 %v1023
          %v1705 = vunpack.c.l.b16 %v1024
          %v1706 = vunpack.c.h.b16 %v1024
          %v1707 = vunpack.c.l.b16 %v1025
          %v1708 = vunpack.c.h.b16 %v1025
          %v1709 = vunpack.c.l.b16 %v1026
          %v1710 = vunpack.c.h.b16 %v1026
          %v1711 = vunpack.c.l.b16 %v1027
          %v1712 = vunpack.c.h.b16 %v1027
          %v1713 = vunpack.c.l.b16 %v1028
          %v1714 = vunpack.c.h.b16 %v1028
          %v1715 = vunpack.c.l.b16 %v1029
          %v1716 = vunpack.c.h.b16 %v1029
          %v1717 = vunpack.c.l.b16 %v1030
          %v1718 = vunpack.c.h.b16 %v1030
          %v1719 = vunpack.c.l.b16 %v1031
          %v1720 = vunpack.c.h.b16 %v1031
          %v1721 = vunpack.c.l.b16 %v1032
          %v1722 = vunpack.c.h.b16 %v1032
          %v1723 = vunpack.c.l.b16 %v1033
          %v1724 = vunpack.c.h.b16 %v1033
          %v1725 = vunpack.c.l.b16 %v1034
          %v1726 = vunpack.c.h.b16 %v1034
          %v1727 = vunpack.c.l.b16 %v1035
          %v1728 = vunpack.c.h.b16 %v1035
          %v1729 = vunpack.c.l.b16 %v1036
          %v1730 = vunpack.c.h.b16 %v1036
          %v1731 = vunpack.c.l.b16 %v1037
          %v1732 = vunpack.c.h.b16 %v1037
          %v1733 = vunpack.c.l.b16 %v1038
          %v1734 = vunpack.c.h.b16 %v1038
          %v1735 = vunpack.c.l.b16 %v1039
          %v1736 = vunpack.c.h.b16 %v1039
          %v1737 = vunpack.c.l.b16 %v1040
          %v1738 = vunpack.c.h.b16 %v1040
          %v1739 = vunpack.c.l.b16 %v1041
          %v1740 = vunpack.c.h.b16 %v1041
          %v1741 = vunpack.c.l.b16 %v1042
          %v1742 = vunpack.c.h.b16 %v1042
          %v1743 = vunpack.c.l.b16 %v1043
          %v1744 = vunpack.c.h.b16 %v1043
          %v1745 = vunpack.c.l.b16 %v1044
          %v1746 = vunpack.c.h.b16 %v1044
          %v1747 = vunpack.c.l.b16 %v1045
          %v1748 = vunpack.c.h.b16 %v1045
          %v1749 = vunpack.c.l.b16 %v1046
          %v1750 = vunpack.c.h.b16 %v1046
          %v1751 = vunpack.c.l.b16 %v1047
          %v1752 = vunpack.c.h.b16 %v1047
          %v1753 = vunpack.c.l.b16 %v1048
          %v1754 = vunpack.c.h.b16 %v1048
          %v1755 = vunpack.c.l.b16 %v1049
          %v1756 = vunpack.c.h.b16 %v1049
          %v1757 = vunpack.c.l.b16 %v1050
          %v1758 = vunpack.c.h.b16 %v1050
          %v1759 = vunpack.c.l.b16 %v1051
          %v1760 = vunpack.c.h.b16 %v1051
          %v1761 = vunpack.c.l.b16 %v1052
          %v1762 = vunpack.c.h.b16 %v1052
          %v1763 = vunpack.c.l.b16 %v1053
          %v1764 = vunpack.c.h.b16 %v1053
          %v1765 = vunpack.c.l.b16 %v1054
          %v1766 = vunpack.c.h.b16 %v1054
          %v1767 = vunpack.c.l.b16 %v1055
          %v1768 = vunpack.c.h.b16 %v1055
          %v1769 = vunpack.c.l.b16 %v1056
          %v1770 = vunpack.c.h.b16 %v1056
          %v1771 = vunpack.c.l.b16 %v1057
          %v1772 = vunpack.c.h.b16 %v1057
          %v1773 = vunpack.c.l.b16 %v1058
          %v1774 = vunpack.c.h.b16 %v1058
          %v1775 = vunpack.c.l.b16 %v1059
          %v1776 = vunpack.c.h.b16 %v1059
          %v1777 = vunpack.c.l.b16 %v1060
          %v1778 = vunpack.c.h.b16 %v1060
          %v1779 = vunpack.c.l.b16 %v1061
          %v1780 = vunpack.c.h.b16 %v1061
          %v1781 = vunpack.c.l.b16 %v1062
          %v1782 = vunpack.c.h.b16 %v1062
          %v1783 = vunpack.c.l.b16 %v1063
          %v1784 = vunpack.c.h.b16 %v1063
          %v1785 = vunpack.c.l.b16 %v1064
          %v1786 = vunpack.c.h.b16 %v1064
          %v1787 = vunpack.c.l.b16 %v1065
          %v1788 = vunpack.c.h.b16 %v1065
          %v1789 = vunpack.c.l.b16 %v1066
          %v1790 = vunpack.c.h.b16 %v1066
          %v1791 = vunpack.c.l.b16 %v1067
          %v1792 = vunpack.c.h.b16 %v1067
          %v1793 = vunpack.c.l.b16 %v1068
          %v1794 = vunpack.c.h.b16 %v1068
          %v1795 = vunpack.c.l.b16 %v1069
          %v1796 = vunpack.c.h.b16 %v1069
          %v1797 = vunpack.c.l.b16 %v1070
          %v1798 = vunpack.c.h.b16 %v1070
          %v1799 = vunpack.c.l.b16 %v1071
          %v1800 = vunpack.c.h.b16 %v1071
          %v1801 = vunpack.c.l.b16 %v1072
          %v1802 = vunpack.c.h.b16 %v1072
          %v1803 = vunpack.c.l.b16 %v1073
          %v1804 = vunpack.c.h.b16 %v1073
          %v1805 = vunpack.c.l.b16 %v1074
          %v1806 = vunpack.c.h.b16 %v1074
          %v1807 = vunpack.c.l.b16 %v1075
          %v1808 = vunpack.c.h.b16 %v1075
          %v1809 = vunpack.c.l.b16 %v1076
          %v1810 = vunpack.c.h.b16 %v1076
          %v1811 = vunpack.c.l.b16 %v1077
          %v1812 = vunpack.c.h.b16 %v1077
          %v1813 = vunpack.c.l.b16 %v1078
          %v1814 = vunpack.c.h.b16 %v1078
          %v1815 = vunpack.c.l.b16 %v1079
          %v1816 = vunpack.c.h.b16 %v1079
          %v1817 = vunpack.c.l.b16 %v1080
          %v1818 = vunpack.c.h.b16 %v1080
          %v1819 = vunpack.c.l.b16 %v1081
          %v1820 = vunpack.c.h.b16 %v1081
          %v1821 = vunpack.c.l.b16 %v1082
          %v1822 = vunpack.c.h.b16 %v1082
          %v1823 = vunpack.c.l.b16 %v1083
          %v1824 = vunpack.c.h.b16 %v1083
          %v1825 = vunpack.c.l.b16 %v1084
          %v1826 = vunpack.c.h.b16 %v1084
          %v1827 = vunpack.c.l.b16 %v1085
          %v1828 = vunpack.c.h.b16 %v1085
          %v1829 = vunpack.c.l.b16 %v1086
          %v1830 = vunpack.c.h.b16 %v1086
          %v1831 = vunpack.c.l.b16 %v1087
          %v1832 = vunpack.c.h.b16 %v1087
          %v1833 = vunpack.c.l.b16 %v1088
          %v1834 = vunpack.c.h.b16 %v1088
          %v1835 = vunpack.c.l.b16 %v1089
          %v1836 = vunpack.c.h.b16 %v1089
          %v1837 = vunpack.c.l.b16 %v1090
          %v1838 = vunpack.c.h.b16 %v1090
          %v1839 = vunpack.c.l.b16 %v1091
          %v1840 = vunpack.c.h.b16 %v1091
          %v1841 = vunpack.c.l.b16 %v1092
          %v1842 = vunpack.c.h.b16 %v1092
          %v1843 = vunpack.c.l.b16 %v1093
          %v1844 = vunpack.c.h.b16 %v1093
          %v1845 = vunpack.c.l.b16 %v1094
          %v1846 = vunpack.c.h.b16 %v1094
          %v1847 = vunpack.c.l.b16 %v1095
          %v1848 = vunpack.c.h.b16 %v1095
          %v1849 = vunpack.c.l.b16 %v1096
          %v1850 = vunpack.c.h.b16 %v1096
          %v1851 = vunpack.c.l.b16 %v1097
          %v1852 = vunpack.c.h.b16 %v1097
          %v1853 = vunpack.c.l.b16 %v1098
          %v1854 = vunpack.c.h.b16 %v1098
          %v1855 = vunpack.c.l.b16 %v1099
          %v1856 = vunpack.c.h.b16 %v1099
          %v1857 = vunpack.c.l.b16 %v1100
          %v1858 = vunpack.c.h.b16 %v1100
          %v1859 = vunpack.c.l.b16 %v1101
          %v1860 = vunpack.c.h.b16 %v1101
          %v1861 = vunpack.c.l.b16 %v1102
          %v1862 = vunpack.c.h.b16 %v1102
          %v1863 = vunpack.c.l.b16 %v1103
          %v1864 = vunpack.c.h.b16 %v1103
          %v1865 = vunpack.c.l.b16 %v1104
          %v1866 = vunpack.c.h.b16 %v1104
          %v1867 = vunpack.c.l.b16 %v1105
          %v1868 = vunpack.c.h.b16 %v1105
          %v1869 = vunpack.c.l.b16 %v1106
          %v1870 = vunpack.c.h.b16 %v1106
          %v1871 = vunpack.c.l.b16 %v1107
          %v1872 = vunpack.c.h.b16 %v1107
          %v1873 = vunpack.c.l.b16 %v1108
          %v1874 = vunpack.c.h.b16 %v1108
          %v1875 = vunpack.c.l.b16 %v1109
          %v1876 = vunpack.c.h.b16 %v1109
          %v1877 = vunpack.c.l.b16 %v1110
          %v1878 = vunpack.c.h.b16 %v1110
          %v1879 = vunpack.c.l.b16 %v1111
          %v1880 = vunpack.c.h.b16 %v1111
          %v1881 = vunpack.c.l.b16 %v1112
          %v1882 = vunpack.c.h.b16 %v1112
          %v1883 = vunpack.c.l.b16 %v1113
          %v1884 = vunpack.c.h.b16 %v1113
          %v1885 = vunpack.c.l.b16 %v1114
          %v1886 = vunpack.c.h.b16 %v1114
          %v1887 = vunpack.c.l.b16 %v1115
          %v1888 = vunpack.c.h.b16 %v1115
          %v1889 = vunpack.c.l.b16 %v1116
          %v1890 = vunpack.c.h.b16 %v1116
          %v1891 = vpack.c.b16 %v1381, %v1379
          %v1892 = vpack.c.b16 %v1382, %v1380
          %v1893 = vpack.c.b16 %v1385, %v1383
          %v1894 = vpack.c.b16 %v1386, %v1384
          %v1895 = vpack.c.b16 %v1389, %v1387
          %v1896 = vpack.c.b16 %v1390, %v1388
          %v1897 = vpack.c.b16 %v1393, %v1391
          %v1898 = vpack.c.b16 %v1394, %v1392
          %v1899 = vpack.c.b16 %v1397, %v1395
          %v1900 = vpack.c.b16 %v1398, %v1396
          %v1901 = vpack.c.b16 %v1401, %v1399
          %v1902 = vpack.c.b16 %v1402, %v1400
          %v1903 = vpack.c.b16 %v1405, %v1403
          %v1904 = vpack.c.b16 %v1406, %v1404
          %v1905 = vpack.c.b16 %v1409, %v1407
          %v1906 = vpack.c.b16 %v1410, %v1408
          %v1907 = vpack.c.b16 %v1413, %v1411
          %v1908 = vpack.c.b16 %v1414, %v1412
          %v1909 = vpack.c.b16 %v1417, %v1415
          %v1910 = vpack.c.b16 %v1418, %v1416
          %v1911 = vpack.c.b16 %v1421, %v1419
          %v1912 = vpack.c.b16 %v1422, %v1420
          %v1913 = vpack.c.b16 %v1425, %v1423
          %v1914 = vpack.c.b16 %v1426, %v1424
          %v1915 = vpack.c.b16 %v1429, %v1427
          %v1916 = vpack.c.b16 %v1430, %v1428
          %v1917 = vpack.c.b16 %v1433, %v1431
          %v1918 = vpack.c.b16 %v1434, %v1432
          %v1919 = vpack.c.b16 %v1437, %v1435
          %v1920 = vpack.c.b16 %v1438, %v1436
          %v1921 = vpack.c.b16 %v1441, %v1439
          %v1922 = vpack.c.b16 %v1442, %v1440
          %v1923 = vpack.c.b16 %v1445, %v1443
          %v1924 = vpack.c.b16 %v1446, %v1444
          %v1925 = vpack.c.b16 %v1449, %v1447
          %v1926 = vpack.c.b16 %v1450, %v1448
          %v1927 = vpack.c.b16 %v1453, %v1451
          %v1928 = vpack.c.b16 %v1454, %v1452
          %v1929 = vpack.c.b16 %v1457, %v1455
          %v1930 = vpack.c.b16 %v1458, %v1456
          %v1931 = vpack.c.b16 %v1461, %v1459
          %v1932 = vpack.c.b16 %v1462, %v1460
          %v1933 = vpack.c.b16 %v1465, %v1463
          %v1934 = vpack.c.b16 %v1466, %v1464
          %v1935 = vpack.c.b16 %v1469, %v1467
          %v1936 = vpack.c.b16 %v1470, %v1468
          %v1937 = vpack.c.b16 %v1473, %v1471
          %v1938 = vpack.c.b16 %v1474, %v1472
          %v1939 = vpack.c.b16 %v1477, %v1475
          %v1940 = vpack.c.b16 %v1478, %v1476
          %v1941 = vpack.c.b16 %v1481, %v1479
          %v1942 = vpack.c.b16 %v1482, %v1480
          %v1943 = vpack.c.b16 %v1485, %v1483
          %v1944 = vpack.c.b16 %v1486, %v1484
          %v1945 = vpack.c.b16 %v1489, %v1487
          %v1946 = vpack.c.b16 %v1490, %v1488
          %v1947 = vpack.c.b16 %v1493, %v1491
          %v1948 = vpack.c.b16 %v1494, %v1492
          %v1949 = vpack.c.b16 %v1497, %v1495
          %v1950 = vpack.c.b16 %v1498, %v1496
          %v1951 = vpack.c.b16 %v1501, %v1499
          %v1952 = vpack.c.b16 %v1502, %v1500
          %v1953 = vpack.c.b16 %v1505, %v1503
          %v1954 = vpack.c.b16 %v1506, %v1504
          %v1955 = vpack.c.b16 %v1509, %v1507
          %v1956 = vpack.c.b16 %v1510, %v1508
          %v1957 = vpack.c.b16 %v1513, %v1511
          %v1958 = vpack.c.b16 %v1514, %v1512
          %v1959 = vpack.c.b16 %v1517, %v1515
          %v1960 = vpack.c.b16 %v1518, %v1516
          %v1961 = vpack.c.b16 %v1521, %v1519
          %v1962 = vpack.c.b16 %v1522, %v1520
          %v1963 = vpack.c.b16 %v1525, %v1523
          %v1964 = vpack.c.b16 %v1526, %v1524
          %v1965 = vpack.c.b16 %v1529, %v1527
          %v1966 = vpack.c.b16 %v1530, %v1528
          %v1967 = vpack.c.b16 %v1533, %v1531
          %v1968 = vpack.c.b16 %v1534, %v1532
          %v1969 = vpack.c.b16 %v1537, %v1535
          %v1970 = vpack.c.b16 %v1538, %v1536
          %v1971 = vpack.c.b16 %v1541, %v1539
          %v1972 = vpack.c.b16 %v1542, %v1540
          %v1973 = vpack.c.b16 %v1545, %v1543
          %v1974 = vpack.c.b16 %v1546, %v1544
          %v1975 = vpack.c.b16 %v1549, %v1547
          %v1976 = vpack.c.b16 %v1550, %v1548
          %v1977 = vpack.c.b16 %v1553, %v1551
          %v1978 = vpack.c.b16 %v1554, %v1552
          %v1979 = vpack.c.b16 %v1557, %v1555
          %v1980 = vpack.c.b16 %v1558, %v1556
          %v1981 = vpack.c.b16 %v1561, %v1559
          %v1982 = vpack.c.b16 %v1562, %v1560
          %v1983 = vpack.c.b16 %v1565, %v1563
          %v1984 = vpack.c.b16 %v1566, %v1564
          %v1985 = vpack.c.b16 %v1569, %v1567
          %v1986 = vpack.c.b16 %v1570, %v1568
          %v1987 = vpack.c.b16 %v1573, %v1571
          %v1988 = vpack.c.b16 %v1574, %v1572
          %v1989 = vpack.c.b16 %v1577, %v1575
          %v1990 = vpack.c.b16 %v1578, %v1576
          %v1991 = vpack.c.b16 %v1581, %v1579
          %v1992 = vpack.c.b16 %v1582, %v1580
          %v1993 = vpack.c.b16 %v1585, %v1583
          %v1994 = vpack.c.b16 %v1586, %v1584
          %v1995 = vpack.c.b16 %v1589, %v1587
          %v1996 = vpack.c.b16 %v1590, %v1588
          %v1997 = vpack.c.b16 %v1593, %v1591
          %v1998 = vpack.c.b16 %v1594, %v1592
          %v1999 = vpack.c.b16 %v1597, %v1595
          %v2000 = vpack.c.b16 %v1598, %v1596
          %v2001 = vpack.c.b16 %v1601, %v1599
          %v2002 = vpack.c.b16 %v1602, %v1600
          %v2003 = vpack.c.b16 %v1605, %v1603
          %v2004 = vpack.c.b16 %v1606, %v1604
          %v2005 = vpack.c.b16 %v1609, %v1607
          %v2006 = vpack.c.b16 %v1610, %v1608
          %v2007 = vpack.c.b16 %v1613, %v1611
          %v2008 = vpack.c.b16 %v1614, %v1612
          %v2009 = vpack.c.b16 %v1617, %v1615
          %v2010 = vpack.c.b16 %v1618, %v1616
          %v2011 = vpack.c.b16 %v1621, %v1619
          %v2012 = vpack.c.b16 %v1622, %v1620
          %v2013 = vpack.c.b16 %v1625, %v1623
          %v2014 = vpack.c.b16 %v1626, %v1624
          %v2015 = vpack.c.b16 %v1629, %v1627
          %v2016 = vpack.c.b16 %v1630, %v1628
          %v2017 = vpack.c.b16 %v1633, %v1631
          %v2018 = vpack.c.b16 %v1634, %v1632
          %v2019 = vpack.c.b16 %v1637, %v1635
          %v2020 = vpack.c.b16 %v1638, %v1636
          %v2021 = vpack.c.b16 %v1641, %v1639
          %v2022 = vpack.c.b16 %v1642, %v1640
          %v2023 = vpack.c.b16 %v1645, %v1643
          %v2024 = vpack.c.b16 %v1646, %v1644
          %v2025 = vpack.c.b16 %v1649, %v1647
          %v2026 = vpack.c.b16 %v1650, %v1648
          %v2027 = vpack.c.b16 %v1653, %v1651
          %v2028 = vpack.c.b16 %v1654, %v1652
          %v2029 = vpack.c.b16 %v1657, %v1655
          %v2030 = vpack.c.b16 %v1658, %v1656
          %v2031 = vpack.c.b16 %v1661, %v1659
          %v2032 = vpack.c.b16 %v1662, %v1660
          %v2033 = vpack.c.b16 %v1665, %v1663
          %v2034 = vpack.c.b16 %v1666, %v1664
          %v2035 = vpack.c.b16 %v1669, %v1667
          %v2036 = vpack.c.b16 %v1670, %v1668
          %v2037 = vpack.c.b16 %v1673, %v1671
          %v2038 = vpack.c.b16 %v1674, %v1672
          %v2039 = vpack.c.b16 %v1677, %v1675
          %v2040 = vpack.c.b16 %v1678, %v1676
          %v2041 = vpack.c.b16 %v1681, %v1679
          %v2042 = vpack.c.b16 %v1682, %v1680
          %v2043 = vpack.c.b16 %v1685, %v1683
          %v2044 = vpack.c.b16 %v1686, %v1684
          %v2045 = vpack.c.b16 %v1689, %v1687
          %v2046 = vpack.c.b16 %v1690, %v1688
          %v2047 = vpack.c.b16 %v1693, %v1691
          %v2048 = vpack.c.b16 %v1694, %v1692
          %v2049 = vpack.c.b16 %v1697, %v1695
          %v2050 = vpack.c.b16 %v1698, %v1696
          %v2051 = vpack.c.b16 %v1701, %v1699
          %v2052 = vpack.c.b16 %v1702, %v1700
          %v2053 = vpack.c.b16 %v1705, %v1703
          %v2054 = vpack.c.b16 %v1706, %v1704
          %v2055 = vpack.c.b16 %v1709, %v1707
          %v2056 = vpack.c.b16 %v1710, %v1708
          %v2057 = vpack.c.b16 %v1713, %v1711
          %v2058 = vpack.c.b16 %v1714, %v1712
          %v2059 = vpack.c.b16 %v1717, %v1715
          %v2060 = vpack.c.b16 %v1718, %v1716
          %v2061 = vpack.c.b16 %v1721, %v1719
          %v2062 = vpack.c.b16 %v1722, %v1720
          %v2063 = vpack.c.b16 %v1725, %v1723
          %v2064 = vpack.c.b16 %v1726, %v1724
          %v2065 = vpack.c.b16 %v1729, %v1727
          %v2066 = vpack.c.b16 %v1730, %v1728
          %v2067 = vpack.c.b16 %v1733, %v1731
          %v2068 = vpack.c.b16 %v1734, %v1732
          %v2069 = vpack.c.b16 %v1737, %v1735
          %v2070 = vpack.c.b16 %v1738, %v1736
          %v2071 = vpack.c.b16 %v1741, %v1739
          %v2072 = vpack.c.b16 %v1742, %v1740
          %v2073 = vpack.c.b16 %v1745, %v1743
          %v2074 = vpack.c.b16 %v1746, %v1744
          %v2075 = vpack.c.b16 %v1749, %v1747
          %v2076 = vpack.c.b16 %v1750, %v1748
          %v2077 = vpack.c.b16 %v1753, %v1751
          %v2078 = vpack.c.b16 %v1754, %v1752
          %v2079 = vpack.c.b16 %v1757, %v1755
          %v2080 = vpack.c.b16 %v1758, %v1756
          %v2081 = vpack.c.b16 %v1761, %v1759
          %v2082 = vpack.c.b16 %v1762, %v1760
          %v2083 = vpack.c.b16 %v1765, %v1763
          %v2084 = vpack.c.b16 %v1766, %v1764
          %v2085 = vpack.c.b16 %v1769, %v1767
          %v2086 = vpack.c.b16 %v1770, %v1768
          %v2087 = vpack.c.b16 %v1773, %v1771
          %v2088 = vpack.c.b16 %v1774, %v1772
          %v2089 = vpack.c.b16 %v1777, %v1775
          %v2090 = vpack.c.b16 %v1778, %v1776
          %v2091 = vpack.c.b16 %v1781, %v1779
          %v2092 = vpack.c.b16 %v1782, %v1780
          %v2093 = vpack.c.b16 %v1785, %v1783
          %v2094 = vpack.c.b16 %v1786, %v1784
          %v2095 = vpack.c.b16 %v1789, %v1787
          %v2096 = vpack.c.b16 %v1790, %v1788
          %v2097 = vpack.c.b16 %v1793, %v1791
          %v2098 = vpack.c.b16 %v1794, %v1792
          %v2099 = vpack.c.b16 %v1797, %v1795
          %v2100 = vpack.c.b16 %v1798, %v1796
          %v2101 = vpack.c.b16 %v1801, %v1799
          %v2102 = vpack.c.b16 %v1802, %v1800
          %v2103 = vpack.c.b16 %v1805, %v1803
          %v2104 = vpack.c.b16 %v1806, %v1804
          %v2105 = vpack.c.b16 %v1809, %v1807
          %v2106 = vpack.c.b16 %v1810, %v1808
          %v2107 = vpack.c.b16 %v1813, %v1811
          %v2108 = vpack.c.b16 %v1814, %v1812
          %v2109 = vpack.c.b16 %v1817, %v1815
          %v2110 = vpack.c.b16 %v1818, %v1816
          %v2111 = vpack.c.b16 %v1821, %v1819
          %v2112 = vpack.c.b16 %v1822, %v1820
          %v2113 = vpack.c.b16 %v1825, %v1823
          %v2114 = vpack.c.b16 %v1826, %v1824
          %v2115 = vpack.c.b16 %v1829, %v1827
          %v2116 = vpack.c.b16 %v1830, %v1828
          %v2117 = vpack.c.b16 %v1833, %v1831
          %v2118 = vpack.c.b16 %v1834, %v1832
          %v2119 = vpack.c.b16 %v1837, %v1835
          %v2120 = vpack.c.b16 %v1838, %v1836
          %v2121 = vpack.c.b16 %v1841, %v1839
          %v2122 = vpack.c.b16 %v1842, %v1840
          %v2123 = vpack.c.b16 %v1845, %v1843
          %v2124 = vpack.c.b16 %v1846, %v1844
          %v2125 = vpack.c.b16 %v1849, %v1847
          %v2126 = vpack.c.b16 %v1850, %v1848
          %v2127 = vpack.c.b16 %v1853, %v1851
          %v2128 = vpack.c.b16 %v1854, %v1852
          %v2129 = vpack.c.b16 %v1857, %v1855
          %v2130 = vpack.c.b16 %v1858, %v1856
          %v2131 = vpack.c.b16 %v1861, %v1859
          %v2132 = vpack.c.b16 %v1862, %v1860
          %v2133 = vpack.c.b16 %v1865, %v1863
          %v2134 = vpack.c.b16 %v1866, %v1864
          %v2135 = vpack.c.b16 %v1869, %v1867
          %v2136 = vpack.c.b16 %v1870, %v1868
          %v2137 = vpack.c.b16 %v1873, %v1871
          %v2138 = vpack.c.b16 %v1874, %v1872
          %v2139 = vpack.c.b16 %v1877, %v1875
          %v2140 = vpack.c.b16 %v1878, %v1876
          %v2141 = vpack.c.b16 %v1881, %v1879
          %v2142 = vpack.c.b16 %v1882, %v1880
          %v2143 = vpack.c.b16 %v1885, %v1883
          %v2144 = vpack.c.b16 %v1886, %v1884
          %v2145 = vpack.c.b16 %v1889, %v1887
          %v2146 = vpack.c.b16 %v1890, %v1888
          %2403 = vmatpush.bf16.msra.mxu0 %v1905
          %2404 = vmatpush.bf16.msra.mxu0 %v1903
          %2405 = vmatpush.bf16.msra.mxu0 %v1901
          %2406 = vmatpush.bf16.msra.mxu0 %v1899
          %2407 = vmatpush.bf16.msra.mxu0 %v1897
          %2408 = vmatpush.bf16.msra.mxu0 %v1895
          %2409 = vmatpush.bf16.msra.mxu0 %v1893
          %2410 = vmatpush.bf16.msra.mxu0 %v1891
          %2411 = vmatmul.bf16.gmra.mxu0 %v845
          %v2412 = vpop.f32.mrf.mxu0
          %v2413 = vadd.f32 %v1119, %v2412
          %v2414 = vpop.f32.mrf.mxu0
          %2415 = vdwg.mxu0
          %2416 = vmatpush.bf16.msra.mxu0 %v1921
          %2417 = vmatpush.bf16.msra.mxu0 %v1919
          %2418 = vmatpush.bf16.msra.mxu0 %v1917
          %2419 = vmatpush.bf16.msra.mxu0 %v1915
          %2420 = vmatpush.bf16.msra.mxu0 %v1913
          %2421 = vmatpush.bf16.msra.mxu0 %v1911
          %2422 = vmatpush.bf16.msra.mxu0 %v1909
          %2423 = vmatpush.bf16.msra.mxu0 %v1907
          %2424 = vmatmul.bf16.gmra.mxu0 %v846
          %v2425 = vpop.f32.mrf.mxu0
          %v2426 = vadd.f32 %v2413, %v2425
          %v2427 = vpop.f32.mrf.mxu0
          %2428 = vdwg.mxu0
          %2429 = vmatpush.bf16.msra.mxu0 %v1937
          %2430 = vmatpush.bf16.msra.mxu0 %v1935
          %2431 = vmatpush.bf16.msra.mxu0 %v1933
          %2432 = vmatpush.bf16.msra.mxu0 %v1931
          %2433 = vmatpush.bf16.msra.mxu0 %v1929
          %2434 = vmatpush.bf16.msra.mxu0 %v1927
          %2435 = vmatpush.bf16.msra.mxu0 %v1925
          %2436 = vmatpush.bf16.msra.mxu0 %v1923
          %2437 = vmatmul.bf16.gmra.mxu0 %v847
          %v2438 = vpop.f32.mrf.mxu0
          %v2439 = vadd.f32 %v2426, %v2438
          %v2440 = vpop.f32.mrf.mxu0
          %2441 = vdwg.mxu0
          %2442 = vmatpush.bf16.msra.mxu0 %v1953
          %2443 = vmatpush.bf16.msra.mxu0 %v1951
          %2444 = vmatpush.bf16.msra.mxu0 %v1949
          %2445 = vmatpush.bf16.msra.mxu0 %v1947
          %2446 = vmatpush.bf16.msra.mxu0 %v1945
          %2447 = vmatpush.bf16.msra.mxu0 %v1943
          %2448 = vmatpush.bf16.msra.mxu0 %v1941
          %2449 = vmatpush.bf16.msra.mxu0 %v1939
          %2450 = vmatmul.bf16.gmra.mxu0 %v848
          %v2451 = vpop.f32.mrf.mxu0
          %v2452 = vadd.f32 %v2439, %v2451
          %v2453 = vpop.f32.mrf.mxu0
          %2454 = vdwg.mxu0
          %2455 = vmatpush.bf16.msra.mxu0 %v1969
          %2456 = vmatpush.bf16.msra.mxu0 %v1967
          %2457 = vmatpush.bf16.msra.mxu0 %v1965
          %2458 = vmatpush.bf16.msra.mxu0 %v1963
          %2459 = vmatpush.bf16.msra.mxu0 %v1961
          %2460 = vmatpush.bf16.msra.mxu0 %v1959
          %2461 = vmatpush.bf16.msra.mxu0 %v1957
          %2462 = vmatpush.bf16.msra.mxu0 %v1955
          %2463 = vmatmul.bf16.gmra.mxu0 %v849
          %v2464 = vpop.f32.mrf.mxu0
          %v2465 = vadd.f32 %v2452, %v2464
          %v2466 = vpop.f32.mrf.mxu0
          %2467 = vdwg.mxu0
          %2468 = vmatpush.bf16.msra.mxu0 %v1985
          %2469 = vmatpush.bf16.msra.mxu0 %v1983
          %2470 = vmatpush.bf16.msra.mxu0 %v1981
          %2471 = vmatpush.bf16.msra.mxu0 %v1979
          %2472 = vmatpush.bf16.msra.mxu0 %v1977
          %2473 = vmatpush.bf16.msra.mxu0 %v1975
          %2474 = vmatpush.bf16.msra.mxu0 %v1973
          %2475 = vmatpush.bf16.msra.mxu0 %v1971
          %2476 = vmatmul.bf16.gmra.mxu0 %v850
          %v2477 = vpop.f32.mrf.mxu0
          %v2478 = vadd.f32 %v2465, %v2477
          %v2479 = vpop.f32.mrf.mxu0
          %2480 = vdwg.mxu0
          %2481 = vmatpush.bf16.msra.mxu0 %v2001
          %2482 = vmatpush.bf16.msra.mxu0 %v1999
          %2483 = vmatpush.bf16.msra.mxu0 %v1997
          %2484 = vmatpush.bf16.msra.mxu0 %v1995
          %2485 = vmatpush.bf16.msra.mxu0 %v1993
          %2486 = vmatpush.bf16.msra.mxu0 %v1991
          %2487 = vmatpush.bf16.msra.mxu0 %v1989
          %2488 = vmatpush.bf16.msra.mxu0 %v1987
          %2489 = vmatmul.bf16.gmra.mxu0 %v851
          %v2490 = vpop.f32.mrf.mxu0
          %v2491 = vadd.f32 %v2478, %v2490
          %v2492 = vpop.f32.mrf.mxu0
          %2493 = vdwg.mxu0
          %2494 = vmatpush.bf16.msra.mxu0 %v2017
          %2495 = vmatpush.bf16.msra.mxu0 %v2015
          %2496 = vmatpush.bf16.msra.mxu0 %v2013
          %2497 = vmatpush.bf16.msra.mxu0 %v2011
          %2498 = vmatpush.bf16.msra.mxu0 %v2009
          %2499 = vmatpush.bf16.msra.mxu0 %v2007
          %2500 = vmatpush.bf16.msra.mxu0 %v2005
          %2501 = vmatpush.bf16.msra.mxu0 %v2003
          %2502 = vmatmul.bf16.gmra.mxu0 %v852
          %v2503 = vpop.f32.mrf.mxu0
          %v2504 = vadd.f32 %v2491, %v2503
          %v2505 = vpop.f32.mrf.mxu0
          %2506 = vdwg.mxu0
          %2507 = vmatpush.bf16.msra.mxu0 %v2033
          %2508 = vmatpush.bf16.msra.mxu0 %v2031
          %2509 = vmatpush.bf16.msra.mxu0 %v2029
          %2510 = vmatpush.bf16.msra.mxu0 %v2027
          %2511 = vmatpush.bf16.msra.mxu0 %v2025
          %2512 = vmatpush.bf16.msra.mxu0 %v2023
          %2513 = vmatpush.bf16.msra.mxu0 %v2021
          %2514 = vmatpush.bf16.msra.mxu0 %v2019
          %2515 = vmatmul.bf16.gmra.mxu0 %v853
          %v2516 = vpop.f32.mrf.mxu0
          %v2517 = vadd.f32 %v2504, %v2516
          %v2518 = vpop.f32.mrf.mxu0
          %2519 = vdwg.mxu0
          %2520 = vmatpush.bf16.msra.mxu0 %v2049
          %2521 = vmatpush.bf16.msra.mxu0 %v2047
          %2522 = vmatpush.bf16.msra.mxu0 %v2045
          %2523 = vmatpush.bf16.msra.mxu0 %v2043
          %2524 = vmatpush.bf16.msra.mxu0 %v2041
          %2525 = vmatpush.bf16.msra.mxu0 %v2039
          %2526 = vmatpush.bf16.msra.mxu0 %v2037
          %2527 = vmatpush.bf16.msra.mxu0 %v2035
          %2528 = vmatmul.bf16.gmra.mxu0 %v854
          %v2529 = vpop.f32.mrf.mxu0
          %v2530 = vadd.f32 %v2517, %v2529
          %v2531 = vpop.f32.mrf.mxu0
          %2532 = vdwg.mxu0
          %2533 = vmatpush.bf16.msra.mxu0 %v2065
          %2534 = vmatpush.bf16.msra.mxu0 %v2063
          %2535 = vmatpush.bf16.msra.mxu0 %v2061
          %2536 = vmatpush.bf16.msra.mxu0 %v2059
          %2537 = vmatpush.bf16.msra.mxu0 %v2057
          %2538 = vmatpush.bf16.msra.mxu0 %v2055
          %2539 = vmatpush.bf16.msra.mxu0 %v2053
          %2540 = vmatpush.bf16.msra.mxu0 %v2051
          %2541 = vmatmul.bf16.gmra.mxu0 %v855
          %v2542 = vpop.f32.mrf.mxu0
          %v2543 = vadd.f32 %v2530, %v2542
          %v2544 = vpop.f32.mrf.mxu0
          %2545 = vdwg.mxu0
          %2546 = vmatpush.bf16.msra.mxu0 %v2081
          %2547 = vmatpush.bf16.msra.mxu0 %v2079
          %2548 = vmatpush.bf16.msra.mxu0 %v2077
          %2549 = vmatpush.bf16.msra.mxu0 %v2075
          %2550 = vmatpush.bf16.msra.mxu0 %v2073
          %2551 = vmatpush.bf16.msra.mxu0 %v2071
          %2552 = vmatpush.bf16.msra.mxu0 %v2069
          %2553 = vmatpush.bf16.msra.mxu0 %v2067
          %2554 = vmatmul.bf16.gmra.mxu0 %v856
          %v2555 = vpop.f32.mrf.mxu0
          %v2556 = vadd.f32 %v2543, %v2555
          %v2557 = vpop.f32.mrf.mxu0
          %2558 = vdwg.mxu0
          %2559 = vmatpush.bf16.msra.mxu0 %v2097
          %2560 = vmatpush.bf16.msra.mxu0 %v2095
          %2561 = vmatpush.bf16.msra.mxu0 %v2093
          %2562 = vmatpush.bf16.msra.mxu0 %v2091
          %2563 = vmatpush.bf16.msra.mxu0 %v2089
          %2564 = vmatpush.bf16.msra.mxu0 %v2087
          %2565 = vmatpush.bf16.msra.mxu0 %v2085
          %2566 = vmatpush.bf16.msra.mxu0 %v2083
          %2567 = vmatmul.bf16.gmra.mxu0 %v857
          %v2568 = vpop.f32.mrf.mxu0
          %v2569 = vadd.f32 %v2556, %v2568
          %v2570 = vpop.f32.mrf.mxu0
          %2571 = vdwg.mxu0
          %2572 = vmatpush.bf16.msra.mxu0 %v2113
          %2573 = vmatpush.bf16.msra.mxu0 %v2111
          %2574 = vmatpush.bf16.msra.mxu0 %v2109
          %2575 = vmatpush.bf16.msra.mxu0 %v2107
          %2576 = vmatpush.bf16.msra.mxu0 %v2105
          %2577 = vmatpush.bf16.msra.mxu0 %v2103
          %2578 = vmatpush.bf16.msra.mxu0 %v2101
          %2579 = vmatpush.bf16.msra.mxu0 %v2099
          %2580 = vmatmul.bf16.gmra.mxu0 %v858
          %v2581 = vpop.f32.mrf.mxu0
          %v2582 = vadd.f32 %v2569, %v2581
          %v2583 = vpop.f32.mrf.mxu0
          %2584 = vdwg.mxu0
          %2585 = vmatpush.bf16.msra.mxu0 %v2129
          %2586 = vmatpush.bf16.msra.mxu0 %v2127
          %2587 = vmatpush.bf16.msra.mxu0 %v2125
          %2588 = vmatpush.bf16.msra.mxu0 %v2123
          %2589 = vmatpush.bf16.msra.mxu0 %v2121
          %2590 = vmatpush.bf16.msra.mxu0 %v2119
          %2591 = vmatpush.bf16.msra.mxu0 %v2117
          %2592 = vmatpush.bf16.msra.mxu0 %v2115
          %2593 = vmatmul.bf16.gmra.mxu0 %v859
          %v2594 = vpop.f32.mrf.mxu0
          %v2595 = vadd.f32 %v2582, %v2594
          %v2596 = vpop.f32.mrf.mxu0
          %2597 = vdwg.mxu0
          %2598 = vmatpush.bf16.msra.mxu0 %v2145
          %2599 = vmatpush.bf16.msra.mxu0 %v2143
          %2600 = vmatpush.bf16.msra.mxu0 %v2141
          %2601 = vmatpush.bf16.msra.mxu0 %v2139
          %2602 = vmatpush.bf16.msra.mxu0 %v2137
          %2603 = vmatpush.bf16.msra.mxu0 %v2135
          %2604 = vmatpush.bf16.msra.mxu0 %v2133
          %2605 = vmatpush.bf16.msra.mxu0 %v2131
          %2606 = vmatmul.bf16.gmra.mxu0 %v860
          %v2607 = vpop.f32.mrf.mxu0
          %v2608 = vadd.f32 %v2595, %v2607
          %v2609 = vpop.f32.mrf.mxu0
          %2610 = vdwg.mxu0
          %2611 = vmatpush.bf16.msra.mxu0 %v1906
          %2612 = vmatpush.bf16.msra.mxu0 %v1904
          %2613 = vmatpush.bf16.msra.mxu0 %v1902
          %2614 = vmatpush.bf16.msra.mxu0 %v1900
          %2615 = vmatpush.bf16.msra.mxu0 %v1898
          %2616 = vmatpush.bf16.msra.mxu0 %v1896
          %2617 = vmatpush.bf16.msra.mxu0 %v1894
          %2618 = vmatpush.bf16.msra.mxu0 %v1892
          %2619 = vmatmul.bf16.gmra.mxu0 %v845
          %v2620 = vpop.f32.mrf.mxu0
          %v2621 = vadd.f32 %v1120, %v2620
          %v2622 = vpop.f32.mrf.mxu0
          %2623 = vdwg.mxu0
          %2624 = vmatpush.bf16.msra.mxu0 %v1922
          %2625 = vmatpush.bf16.msra.mxu0 %v1920
          %2626 = vmatpush.bf16.msra.mxu0 %v1918
          %2627 = vmatpush.bf16.msra.mxu0 %v1916
          %2628 = vmatpush.bf16.msra.mxu0 %v1914
          %2629 = vmatpush.bf16.msra.mxu0 %v1912
          %2630 = vmatpush.bf16.msra.mxu0 %v1910
          %2631 = vmatpush.bf16.msra.mxu0 %v1908
          %2632 = vmatmul.bf16.gmra.mxu0 %v846
          %v2633 = vpop.f32.mrf.mxu0
          %v2634 = vadd.f32 %v2621, %v2633
          %v2635 = vpop.f32.mrf.mxu0
          %2636 = vdwg.mxu0
          %2637 = vmatpush.bf16.msra.mxu0 %v1938
          %2638 = vmatpush.bf16.msra.mxu0 %v1936
          %2639 = vmatpush.bf16.msra.mxu0 %v1934
          %2640 = vmatpush.bf16.msra.mxu0 %v1932
          %2641 = vmatpush.bf16.msra.mxu0 %v1930
          %2642 = vmatpush.bf16.msra.mxu0 %v1928
          %2643 = vmatpush.bf16.msra.mxu0 %v1926
          %2644 = vmatpush.bf16.msra.mxu0 %v1924
          %2645 = vmatmul.bf16.gmra.mxu0 %v847
          %v2646 = vpop.f32.mrf.mxu0
          %v2647 = vadd.f32 %v2634, %v2646
          %v2648 = vpop.f32.mrf.mxu0
          %2649 = vdwg.mxu0
          %2650 = vmatpush.bf16.msra.mxu0 %v1954
          %2651 = vmatpush.bf16.msra.mxu0 %v1952
          %2652 = vmatpush.bf16.msra.mxu0 %v1950
          %2653 = vmatpush.bf16.msra.mxu0 %v1948
          %2654 = vmatpush.bf16.msra.mxu0 %v1946
          %2655 = vmatpush.bf16.msra.mxu0 %v1944
          %2656 = vmatpush.bf16.msra.mxu0 %v1942
          %2657 = vmatpush.bf16.msra.mxu0 %v1940
          %2658 = vmatmul.bf16.gmra.mxu0 %v848
          %v2659 = vpop.f32.mrf.mxu0
          %v2660 = vadd.f32 %v2647, %v2659
          %v2661 = vpop.f32.mrf.mxu0
          %2662 = vdwg.mxu0
          %2663 = vmatpush.bf16.msra.mxu0 %v1970
          %2664 = vmatpush.bf16.msra.mxu0 %v1968
          %2665 = vmatpush.bf16.msra.mxu0 %v1966
          %2666 = vmatpush.bf16.msra.mxu0 %v1964
          %2667 = vmatpush.bf16.msra.mxu0 %v1962
          %2668 = vmatpush.bf16.msra.mxu0 %v1960
          %2669 = vmatpush.bf16.msra.mxu0 %v1958
          %2670 = vmatpush.bf16.msra.mxu0 %v1956
          %2671 = vmatmul.bf16.gmra.mxu0 %v849
          %v2672 = vpop.f32.mrf.mxu0
          %v2673 = vadd.f32 %v2660, %v2672
          %v2674 = vpop.f32.mrf.mxu0
          %2675 = vdwg.mxu0
          %2676 = vmatpush.bf16.msra.mxu0 %v1986
          %2677 = vmatpush.bf16.msra.mxu0 %v1984
          %2678 = vmatpush.bf16.msra.mxu0 %v1982
          %2679 = vmatpush.bf16.msra.mxu0 %v1980
          %2680 = vmatpush.bf16.msra.mxu0 %v1978
          %2681 = vmatpush.bf16.msra.mxu0 %v1976
          %2682 = vmatpush.bf16.msra.mxu0 %v1974
          %2683 = vmatpush.bf16.msra.mxu0 %v1972
          %2684 = vmatmul.bf16.gmra.mxu0 %v850
          %v2685 = vpop.f32.mrf.mxu0
          %v2686 = vadd.f32 %v2673, %v2685
          %v2687 = vpop.f32.mrf.mxu0
          %2688 = vdwg.mxu0
          %2689 = vmatpush.bf16.msra.mxu0 %v2002
          %2690 = vmatpush.bf16.msra.mxu0 %v2000
          %2691 = vmatpush.bf16.msra.mxu0 %v1998
          %2692 = vmatpush.bf16.msra.mxu0 %v1996
          %2693 = vmatpush.bf16.msra.mxu0 %v1994
          %2694 = vmatpush.bf16.msra.mxu0 %v1992
          %2695 = vmatpush.bf16.msra.mxu0 %v1990
          %2696 = vmatpush.bf16.msra.mxu0 %v1988
          %2697 = vmatmul.bf16.gmra.mxu0 %v851
          %v2698 = vpop.f32.mrf.mxu0
          %v2699 = vadd.f32 %v2686, %v2698
          %v2700 = vpop.f32.mrf.mxu0
          %2701 = vdwg.mxu0
          %2702 = vmatpush.bf16.msra.mxu0 %v2018
          %2703 = vmatpush.bf16.msra.mxu0 %v2016
          %2704 = vmatpush.bf16.msra.mxu0 %v2014
          %2705 = vmatpush.bf16.msra.mxu0 %v2012
          %2706 = vmatpush.bf16.msra.mxu0 %v2010
          %2707 = vmatpush.bf16.msra.mxu0 %v2008
          %2708 = vmatpush.bf16.msra.mxu0 %v2006
          %2709 = vmatpush.bf16.msra.mxu0 %v2004
          %2710 = vmatmul.bf16.gmra.mxu0 %v852
          %v2711 = vpop.f32.mrf.mxu0
          %v2712 = vadd.f32 %v2699, %v2711
          %v2713 = vpop.f32.mrf.mxu0
          %2714 = vdwg.mxu0
          %2715 = vmatpush.bf16.msra.mxu0 %v2034
          %2716 = vmatpush.bf16.msra.mxu0 %v2032
          %2717 = vmatpush.bf16.msra.mxu0 %v2030
          %2718 = vmatpush.bf16.msra.mxu0 %v2028
          %2719 = vmatpush.bf16.msra.mxu0 %v2026
          %2720 = vmatpush.bf16.msra.mxu0 %v2024
          %2721 = vmatpush.bf16.msra.mxu0 %v2022
          %2722 = vmatpush.bf16.msra.mxu0 %v2020
          %2723 = vmatmul.bf16.gmra.mxu0 %v853
          %v2724 = vpop.f32.mrf.mxu0
          %v2725 = vadd.f32 %v2712, %v2724
          %v2726 = vpop.f32.mrf.mxu0
          %2727 = vdwg.mxu0
          %2728 = vmatpush.bf16.msra.mxu0 %v2050
          %2729 = vmatpush.bf16.msra.mxu0 %v2048
          %2730 = vmatpush.bf16.msra.mxu0 %v2046
          %2731 = vmatpush.bf16.msra.mxu0 %v2044
          %2732 = vmatpush.bf16.msra.mxu0 %v2042
          %2733 = vmatpush.bf16.msra.mxu0 %v2040
          %2734 = vmatpush.bf16.msra.mxu0 %v2038
          %2735 = vmatpush.bf16.msra.mxu0 %v2036
          %2736 = vmatmul.bf16.gmra.mxu0 %v854
          %v2737 = vpop.f32.mrf.mxu0
          %v2738 = vadd.f32 %v2725, %v2737
          %v2739 = vpop.f32.mrf.mxu0
          %2740 = vdwg.mxu0
          %2741 = vmatpush.bf16.msra.mxu0 %v2066
          %2742 = vmatpush.bf16.msra.mxu0 %v2064
          %2743 = vmatpush.bf16.msra.mxu0 %v2062
          %2744 = vmatpush.bf16.msra.mxu0 %v2060
          %2745 = vmatpush.bf16.msra.mxu0 %v2058
          %2746 = vmatpush.bf16.msra.mxu0 %v2056
          %2747 = vmatpush.bf16.msra.mxu0 %v2054
          %2748 = vmatpush.bf16.msra.mxu0 %v2052
          %2749 = vmatmul.bf16.gmra.mxu0 %v855
          %v2750 = vpop.f32.mrf.mxu0
          %v2751 = vadd.f32 %v2738, %v2750
          %v2752 = vpop.f32.mrf.mxu0
          %2753 = vdwg.mxu0
          %2754 = vmatpush.bf16.msra.mxu0 %v2082
          %2755 = vmatpush.bf16.msra.mxu0 %v2080
          %2756 = vmatpush.bf16.msra.mxu0 %v2078
          %2757 = vmatpush.bf16.msra.mxu0 %v2076
          %2758 = vmatpush.bf16.msra.mxu0 %v2074
          %2759 = vmatpush.bf16.msra.mxu0 %v2072
          %2760 = vmatpush.bf16.msra.mxu0 %v2070
          %2761 = vmatpush.bf16.msra.mxu0 %v2068
          %2762 = vmatmul.bf16.gmra.mxu0 %v856
          %v2763 = vpop.f32.mrf.mxu0
          %v2764 = vadd.f32 %v2751, %v2763
          %v2765 = vpop.f32.mrf.mxu0
          %2766 = vdwg.mxu0
          %2767 = vmatpush.bf16.msra.mxu0 %v2098
          %2768 = vmatpush.bf16.msra.mxu0 %v2096
          %2769 = vmatpush.bf16.msra.mxu0 %v2094
          %2770 = vmatpush.bf16.msra.mxu0 %v2092
          %2771 = vmatpush.bf16.msra.mxu0 %v2090
          %2772 = vmatpush.bf16.msra.mxu0 %v2088
          %2773 = vmatpush.bf16.msra.mxu0 %v2086
          %2774 = vmatpush.bf16.msra.mxu0 %v2084
          %2775 = vmatmul.bf16.gmra.mxu0 %v857
          %v2776 = vpop.f32.mrf.mxu0
          %v2777 = vadd.f32 %v2764, %v2776
          %v2778 = vpop.f32.mrf.mxu0
          %2779 = vdwg.mxu0
          %2780 = vmatpush.bf16.msra.mxu0 %v2114
          %2781 = vmatpush.bf16.msra.mxu0 %v2112
          %2782 = vmatpush.bf16.msra.mxu0 %v2110
          %2783 = vmatpush.bf16.msra.mxu0 %v2108
          %2784 = vmatpush.bf16.msra.mxu0 %v2106
          %2785 = vmatpush.bf16.msra.mxu0 %v2104
          %2786 = vmatpush.bf16.msra.mxu0 %v2102
          %2787 = vmatpush.bf16.msra.mxu0 %v2100
          %2788 = vmatmul.bf16.gmra.mxu0 %v858
          %v2789 = vpop.f32.mrf.mxu0
          %v2790 = vadd.f32 %v2777, %v2789
          %v2791 = vpop.f32.mrf.mxu0
          %2792 = vdwg.mxu0
          %2793 = vmatpush.bf16.msra.mxu0 %v2130
          %2794 = vmatpush.bf16.msra.mxu0 %v2128
          %2795 = vmatpush.bf16.msra.mxu0 %v2126
          %2796 = vmatpush.bf16.msra.mxu0 %v2124
          %2797 = vmatpush.bf16.msra.mxu0 %v2122
          %2798 = vmatpush.bf16.msra.mxu0 %v2120
          %2799 = vmatpush.bf16.msra.mxu0 %v2118
          %2800 = vmatpush.bf16.msra.mxu0 %v2116
          %2801 = vmatmul.bf16.gmra.mxu0 %v859
          %v2802 = vpop.f32.mrf.mxu0
          %v2803 = vadd.f32 %v2790, %v2802
          %v2804 = vpop.f32.mrf.mxu0
          %2805 = vdwg.mxu0
          %2806 = vmatpush.bf16.msra.mxu0 %v2146
          %2807 = vmatpush.bf16.msra.mxu0 %v2144
          %2808 = vmatpush.bf16.msra.mxu0 %v2142
          %2809 = vmatpush.bf16.msra.mxu0 %v2140
          %2810 = vmatpush.bf16.msra.mxu0 %v2138
          %2811 = vmatpush.bf16.msra.mxu0 %v2136
          %2812 = vmatpush.bf16.msra.mxu0 %v2134
          %2813 = vmatpush.bf16.msra.mxu0 %v2132
          %2814 = vmatmul.bf16.gmra.mxu0 %v860
          %v2815 = vpop.f32.mrf.mxu0
          %v2816 = vadd.f32 %v2803, %v2815
          %v2817 = vpop.f32.mrf.mxu0
          %2818 = vdwg.mxu0
          %v2819 = vpack.c.bf16 %v2608, %v2608
          %v2820 = vpack.c.bf16 %v2816, %v2816
          %v2821 = vld [vmem:[%s357] sm:$0xf]
          %v2822 = vld [vmem:[%s357 + $0x4] sm:$0xf]
          %v2823 = vld [vmem:[%s357 + $0x8] sm:$0xf]
          %v2824 = vld [vmem:[%s357 + $0xc] sm:$0xf]
          %v2825 = vld [vmem:[%s357 + $0x10] sm:$0xf]
          %v2826 = vld [vmem:[%s357 + $0x14] sm:$0xf]
          %v2827 = vld [vmem:[%s357 + $0x18] sm:$0xf]
          %v2828 = vld [vmem:[%s357 + $0x1c] sm:$0xf]
          %v2829 = vld [vmem:[%s357 + $0x20] sm:$0xf]
          %v2830 = vld [vmem:[%s357 + $0x24] sm:$0xf]
          %v2831 = vld [vmem:[%s357 + $0x28] sm:$0xf]
          %v2832 = vld [vmem:[%s357 + $0x2c] sm:$0xf]
          %v2833 = vld [vmem:[%s357 + $0x30] sm:$0xf]
          %v2834 = vld [vmem:[%s357 + $0x34] sm:$0xf]
          %v2835 = vld [vmem:[%s357 + $0x38] sm:$0xf]
          %v2836 = vld [vmem:[%s357 + $0x3c] sm:$0xf]
          %v2837 = vld [vmem:[%s357 + $0x40] sm:$0xf]
          %v2838 = vld [vmem:[%s357 + $0x44] sm:$0xf]
          %v2839 = vld [vmem:[%s357 + $0x48] sm:$0xf]
          %v2840 = vld [vmem:[%s357 + $0x4c] sm:$0xf]
          %v2841 = vld [vmem:[%s357 + $0x50] sm:$0xf]
          %v2842 = vld [vmem:[%s357 + $0x54] sm:$0xf]
          %v2843 = vld [vmem:[%s357 + $0x58] sm:$0xf]
          %v2844 = vld [vmem:[%s357 + $0x5c] sm:$0xf]
          %v2845 = vld [vmem:[%s357 + $0x60] sm:$0xf]
          %v2846 = vld [vmem:[%s357 + $0x64] sm:$0xf]
          %v2847 = vld [vmem:[%s357 + $0x68] sm:$0xf]
          %v2848 = vld [vmem:[%s357 + $0x6c] sm:$0xf]
          %v2849 = vld [vmem:[%s357 + $0x70] sm:$0xf]
          %v2850 = vld [vmem:[%s357 + $0x74] sm:$0xf]
          %v2851 = vld [vmem:[%s357 + $0x78] sm:$0xf]
          %v2852 = vld [vmem:[%s357 + $0x7c] sm:$0xf]
          %v2853 = vld [vmem:[%s366] sm:$0x1]
          %v2855 = vperm.slane %v2853, 0
          %v2889 = vunpack.c.l.b16 %v2821
          %v2890 = vunpack.c.l.b16 %v2822
          %v2891 = vunpack.c.l.b16 %v2823
          %v2892 = vunpack.c.l.b16 %v2824
          %v2893 = vunpack.c.l.b16 %v2825
          %v2894 = vunpack.c.l.b16 %v2826
          %v2895 = vunpack.c.l.b16 %v2827
          %v2896 = vunpack.c.l.b16 %v2828
          %v2897 = vunpack.c.l.b16 %v2829
          %v2898 = vunpack.c.l.b16 %v2830
          %v2899 = vunpack.c.l.b16 %v2831
          %v2900 = vunpack.c.l.b16 %v2832
          %v2901 = vunpack.c.l.b16 %v2833
          %v2902 = vunpack.c.l.b16 %v2834
          %v2903 = vunpack.c.l.b16 %v2835
          %v2904 = vunpack.c.l.b16 %v2836
          %v2905 = vunpack.c.l.b16 %v2837
          %v2906 = vunpack.c.l.b16 %v2838
          %v2907 = vunpack.c.l.b16 %v2839
          %v2908 = vunpack.c.l.b16 %v2840
          %v2909 = vunpack.c.l.b16 %v2841
          %v2910 = vunpack.c.l.b16 %v2842
          %v2911 = vunpack.c.l.b16 %v2843
          %v2912 = vunpack.c.l.b16 %v2844
          %v2913 = vunpack.c.l.b16 %v2845
          %v2914 = vunpack.c.l.b16 %v2846
          %v2915 = vunpack.c.l.b16 %v2847
          %v2916 = vunpack.c.l.b16 %v2848
          %v2917 = vunpack.c.l.b16 %v2849
          %v2918 = vunpack.c.l.b16 %v2850
          %v2919 = vunpack.c.l.b16 %v2851
          %v2920 = vunpack.c.l.b16 %v2852
          %v2921 = vpack.c.b16 %v2890, %v2889
          %v2922 = vpack.c.b16 %v2892, %v2891
          %v2923 = vpack.c.b16 %v2894, %v2893
          %v2924 = vpack.c.b16 %v2896, %v2895
          %v2925 = vpack.c.b16 %v2898, %v2897
          %v2926 = vpack.c.b16 %v2900, %v2899
          %v2927 = vpack.c.b16 %v2902, %v2901
          %v2928 = vpack.c.b16 %v2904, %v2903
          %v2929 = vpack.c.b16 %v2906, %v2905
          %v2930 = vpack.c.b16 %v2908, %v2907
          %v2931 = vpack.c.b16 %v2910, %v2909
          %v2932 = vpack.c.b16 %v2912, %v2911
          %v2933 = vpack.c.b16 %v2914, %v2913
          %v2934 = vpack.c.b16 %v2916, %v2915
          %v2935 = vpack.c.b16 %v2918, %v2917
          %v2936 = vpack.c.b16 %v2920, %v2919
          %2953 = vmatpush.bf16.msra.mxu0 %v2928
          %2954 = vmatpush.bf16.msra.mxu0 %v2927
          %2955 = vmatpush.bf16.msra.mxu0 %v2926
          %2956 = vmatpush.bf16.msra.mxu0 %v2925
          %2957 = vmatpush.bf16.msra.mxu0 %v2924
          %2958 = vmatpush.bf16.msra.mxu0 %v2923
          %2959 = vmatpush.bf16.msra.mxu0 %v2922
          %2960 = vmatpush.bf16.msra.mxu0 %v2921
          %2961 = vmatmul.bf16.gmra.mxu0 %v2819
          %v2962 = vpop.f32.mrf.mxu0
          %v2963 = vadd.f32 %v2855, %v2962
          %v2964 = vpop.f32.mrf.mxu0
          %2965 = vdwg.mxu0
          %2966 = vmatpush.bf16.msra.mxu0 %v2936
          %2967 = vmatpush.bf16.msra.mxu0 %v2935
          %2968 = vmatpush.bf16.msra.mxu0 %v2934
          %2969 = vmatpush.bf16.msra.mxu0 %v2933
          %2970 = vmatpush.bf16.msra.mxu0 %v2932
          %2971 = vmatpush.bf16.msra.mxu0 %v2931
          %2972 = vmatpush.bf16.msra.mxu0 %v2930
          %2973 = vmatpush.bf16.msra.mxu0 %v2929
          %2974 = vmatmul.bf16.gmra.mxu0 %v2820
          %v2975 = vpop.f32.mrf.mxu0
          %v2976 = vadd.f32 %v2963, %v2975
          %v2977 = vpop.f32.mrf.mxu0
          %2978 = vdwg.mxu0
          %2979 = vst [vmem:[%s412] sm:$0x3] %v2976
        $region68: #{tpu_custom_call.1} parent=39 // pred_fallthru
          _
        %s2980 = sand.u32 %s180, 1
        %s2981 = scalar_lea.sflag [#allocation5], %s2980
        %s2982 = sand.u32 %s180, 1
        %s2983 = smul.addr %s2982, 2
        %s2984 = scalar_lea.vmem [#allocation12], %s2983
        // Predicated region
        $region69: #{tpu_custom_call.1} parent=39 // pred_check
          %p2985 = pneg %p190
        $region70: #{tpu_custom_call.1} parent=39 // pred_check_branch
          %2987 = sbr.rel (%p2985) target = $region72
        $region71: #{tpu_custom_call.1} parent=39 // pred_region
          %2989 = vsyncadd %s2981, 0
          %s2990 = smul.addr %s32, 2
          %s2991 = scalar_lea.hbm %s5, %s2990
          %s2993 = sshll.u32 %s2984, 4
          %s2994 = int_to_ptr.vmem [resolvable:$true] %s2993
          %s2995 = sshll.u32 %s2991, 4
          %s2996 = int_to_ptr.hbm [resolvable:$true] %s2995
          %2998 = dma.vmem_to_hbm [thread:$0]  %s2994, 32, %s2996, %s2981
        $region72: #{tpu_custom_call.1} parent=39 // pred_fallthru
          _
      $region40: #{tpu_custom_call.1} parent=5 // pred_fallthru
        _
      %p2999 = scmp.le.s32.totalorder 2, %s23
      // Predicated region
      $region73: #{tpu_custom_call.1} parent=5 // pred_check
        %p3000 = pneg %p2999
      $region74: #{tpu_custom_call.1} parent=5 // pred_check_branch
        %3002 = sbr.rel (%p3000) target = $region76
      $region75: #{tpu_custom_call.1} parent=5 // pred_region
        %s3003 = ssub.s32 %s23, 2
        // Predicated region
        $region77: #{tpu_custom_call.1} parent=75 // pred_check
          %p3004 = pneg %p196
        $region78: #{tpu_custom_call.1} parent=75 // pred_check_branch
          %3006 = sbr.rel (%p3004) target = $region80
        $region79: #{tpu_custom_call.1} parent=75 // pred_region
          %s3007 = sand.u32 %s181, 1
          %s3008 = scalar_lea.sflag [#allocation5], %s3007
          %s3009 = sand.u32 %s181, 1
          %s3010 = smul.addr %s3009, 2
          %s3011 = scalar_lea.vmem [#allocation12], %s3010
          %3013 = dma.done %s3008, 32
        $region80: #{tpu_custom_call.1} parent=75 // pred_fallthru
          _
      $region76: #{tpu_custom_call.1} parent=5 // pred_fallthru
        _
    $region6: #{tpu_custom_call.1} parent=1 // loop_footer
      %s27 = sadd.s32 1, %s23
    $region7: #{tpu_custom_call.1} parent=1 // loop_footer_branch
      %22 = sbr.rel target = $region3
    $region8: #{tpu_custom_call.1} parent=1 // loop_exit
      _
    %3014 = vsyncpa [#allocation4], 1
    %s3015 = scalar_lea.sflag [#allocation4], 1
    %3016 = vsyncpa %s3015, 1
    %3017 = vsyncpa [#allocation7], 1
    %s3018 = scalar_lea.sflag [#allocation7], 1
    %3019 = vsyncpa %s3018, 1
    %3020 = vsyncpa [#allocation10], 1
    %s3021 = scalar_lea.sflag [#allocation10], 1
    %3022 = vsyncpa %s3021, 1
    %3023 = vsyncpa [#allocation5], 1
    %s3024 = scalar_lea.sflag [#allocation5], 1
    %3025 = vsyncpa %s3024, 1

</llo_original>
